<compile_context>
chip_gen: v5e
topology: v5e:2x2
jax: 0.10.0
libtpu: 0.0.40
codegen_flags: <defaults>
</compile_context>

<pallas_src>
import functools

import numpy as np
import jax
import jax.numpy as jnp
from jax import lax
from jax.experimental import pallas as pl
from jax.experimental.pallas import tpu as pltpu


# ----------------------------- anchor utilities (A2J) -----------------------------

def generate_anchors(P_h, P_w):
    P_h = np.asarray(P_h, dtype=np.float64)
    P_w = np.asarray(P_w, dtype=np.float64)
    num_anchors = len(P_h) * len(P_w)
    anchors = np.zeros((num_anchors, 2), dtype=np.float64)
    k = 0
    for i in range(len(P_w)):
        for j in range(len(P_h)):
            anchors[k, 1] = P_w[j]
            anchors[k, 0] = P_h[i]
            k += 1
    return anchors


def shift(shape, stride, anchors):
    shift_h = np.arange(0, shape[0]) * stride
    shift_w = np.arange(0, shape[1]) * stride
    shift_h, shift_w = np.meshgrid(shift_h, shift_w)
    shifts = np.vstack((shift_h.ravel(), shift_w.ravel())).transpose()
    A = anchors.shape[0]
    K = shifts.shape[0]
    all_anchors = anchors.reshape((1, A, 2)) + shifts.reshape((1, K, 2)).transpose((1, 0, 2))
    return all_anchors.reshape((K * A, 2))


# ------------------------- generic im2col 3x3 conv kernel --------------------------

def _conv_mm_kernel(apply_relu, x_ref, w_ref, b_ref, o_ref):
    # x_ref: (1, T, 9*Cin) bf16 im2col tile; w_ref: (9*Cin, Cout) bf16; b_ref: (1, Cout) f32
    # o_ref: (1, T, Cout) f32
    acc = jnp.dot(x_ref[0], w_ref[...], preferred_element_type=jnp.float32)
    acc = acc + b_ref[...]
    if apply_relu:
        acc = jnp.maximum(acc, 0.0)
    o_ref[0] = acc


def conv3x3(x_nhwc, w_hwio, bias, relu, hw_tile=None):
    """3x3 conv, stride 1, padding 1 (NHWC), bf16 matmul inputs, f32 accumulation."""
    B, H, W, Cin = x_nhwc.shape
    Cout = w_hwio.shape[-1]
    HW = H * W
    K = 9 * Cin

    # Wrapper-side im2col: taps are fused into the channel (lane) axis so nothing pads
    # each tap's Cin up to 128 lanes separately.  bf16 halves HBM/DMA bytes.
    xb = x_nhwc.astype(jnp.bfloat16)
    xp = jnp.pad(xb, ((0, 0), (1, 1), (1, 1), (0, 0)))
    cols = jnp.concatenate(
        [xp[:, dy:dy + H, dx:dx + W, :] for dy in range(3) for dx in range(3)], axis=-1)
    cols = cols.reshape(B, HW, K)
    wk = w_hwio.reshape(K, Cout).astype(jnp.bfloat16)
    b2 = bias.reshape(1, Cout).astype(jnp.float32)

    if hw_tile is None:
        hw_tile = min(1024, max(256, HW // 4))   # >=4 HW tiles when possible -> pipelining
    hw_tile = min(hw_tile, HW)
    assert HW % hw_tile == 0
    nt = HW // hw_tile

    out = pl.pallas_call(
        functools.partial(_conv_mm_kernel, relu),
        out_shape=jax.ShapeDtypeStruct((B, HW, Cout), jnp.float32),
        grid_spec=pltpu.PrefetchScalarGridSpec(
            num_scalar_prefetch=0,
            grid=(B, nt),
            in_specs=[
                pl.BlockSpec((1, hw_tile, K), lambda b, t: (b, t, 0)),
                pl.BlockSpec((K, Cout), lambda b, t: (0, 0)),
                pl.BlockSpec((1, Cout), lambda b, t: (0, 0)),
            ],
            out_specs=pl.BlockSpec((1, hw_tile, Cout), lambda b, t: (b, t, 0)),
        ),
        compiler_params=pltpu.CompilerParams(
            dimension_semantics=("parallel", "parallel")),
    )(cols, wk, b2)
    return out.reshape(B, H, W, Cout)


# ----------------------- fused A2J head (4x conv+relu + out conv) ------------------

def _fused_head_kernel(H, W, n_relu, x_ref, w_ref, b_ref, wo_ref, bo_ref, o_ref):
    # x_ref:  (1, HW, Cf) f32 feature map (stays resident in VMEM for the whole head)
    # w_ref:  (n_relu, 9*Cf, Cf) bf16 ; b_ref: (n_relu, 1, Cf) f32
    # wo_ref: (9*Cf, Cout) bf16 ; bo_ref: (1, Cout) f32 ; o_ref: (1, HW, Cout) f32
    HW = H * W
    Cf = x_ref.shape[-1]
    PAD = 24  # multiple of 8 >= max |tap offset| (W+1): keeps the zero-concat aligned

    # Per-tap (flat row offset, boundary-validity mask) -- geometry only, hoisted.
    row = lax.broadcasted_iota(jnp.int32, (HW, 1), 0)
    yy = row // W
    xx = row % W
    taps = []
    for dy in range(3):
        for dx in range(3):
            oy, ox = dy - 1, dx - 1
            valid = ((yy + oy >= 0) & (yy + oy < H) &
                     (xx + ox >= 0) & (xx + ox < W))
            taps.append((oy * W + ox, valid))

    zpad = jnp.zeros((PAD, Cf), jnp.float32)

    def im2col(feat):
        # feat: (HW, Cf) f32 -> (HW, 9*Cf) bf16 patch matrix built fully in VMEM.
        padded = jnp.concatenate([zpad, feat, zpad], axis=0)
        cols = [jnp.where(valid, padded[PAD + off:PAD + off + HW, :], 0.0)
                for off, valid in taps]
        return jnp.concatenate(cols, axis=-1).astype(jnp.bfloat16)

    feat = x_ref[0]
    for l in range(n_relu):  # static unroll; intermediates never touch HBM
        y = jnp.dot(im2col(feat), w_ref[l], preferred_element_type=jnp.float32) + b_ref[l]
        feat = jnp.maximum(y, 0.0)
    out = jnp.dot(im2col(feat), wo_ref[...], preferred_element_type=jnp.float32) + bo_ref[...]
    o_ref[0] = out


def fused_head(feat_nhwc, convs, out_w, out_b):
    """Run the whole head (n relu convs + output conv) as one VMEM-resident kernel."""
    B, H, W, Cf = feat_nhwc.shape
    HW = H * W
    n_relu = len(convs)
    Cout = out_w.shape[-1]
    for w, _ in convs:
        assert w.shape == (3, 3, Cf, Cf)

    w_stack = jnp.stack([w.reshape(9 * Cf, Cf) for w, _ in convs]).astype(jnp.bfloat16)
    b_stack = jnp.stack([b.reshape(1, Cf) for _, b in convs]).astype(jnp.float32)
    wo = out_w.reshape(9 * Cf, Cout).astype(jnp.bfloat16)
    bo = out_b.reshape(1, Cout).astype(jnp.float32)
    x_flat = feat_nhwc.reshape(B, HW, Cf).astype(jnp.float32)

    out = pl.pallas_call(
        functools.partial(_fused_head_kernel, H, W, n_relu),
        out_shape=jax.ShapeDtypeStruct((B, HW, Cout), jnp.float32),
        grid_spec=pltpu.PrefetchScalarGridSpec(
            num_scalar_prefetch=0,
            grid=(B,),
            in_specs=[
                pl.BlockSpec((1, HW, Cf), lambda b: (b, 0, 0)),
                pl.BlockSpec((n_relu, 9 * Cf, Cf), lambda b: (0, 0, 0)),
                pl.BlockSpec((n_relu, 1, Cf), lambda b: (0, 0, 0)),
                pl.BlockSpec((9 * Cf, Cout), lambda b: (0, 0)),
                pl.BlockSpec((1, Cout), lambda b: (0, 0)),
            ],
            out_specs=pl.BlockSpec((1, HW, Cout), lambda b: (b, 0, 0)),
        ),
        compiler_params=pltpu.CompilerParams(dimension_semantics=("parallel",)),
    )(x_flat, w_stack, b_stack, wo, bo)
    return out  # (B, HW, Cout)


# --------------------------- A2J softmax-weighted aggregation ----------------------

def _a2j_kernel(cls_ref, reg_ref, anch_ref, wh_ref, temp_ref,
                pose_ref, surr_ref, regout_ref):
    # cls_ref: (1, C, A) f32 ; reg_ref: (1, 2, C, A) f32 ; anch_ref: (2, C, A) f32
    # wh_ref: SMEM (2,) f32 ; temp_ref: SMEM (1,) f32
    # pose_ref / surr_ref: (1, 2, C) f32 ; regout_ref: (1, 2, C, A) f32
    logits = cls_ref[0] * temp_ref[0]                       # (C, A): anchors on lanes
    m = jnp.max(logits, axis=-1, keepdims=True)
    e = jnp.exp(logits - m)
    rw = e / jnp.sum(e, axis=-1, keepdims=True)             # softmax over anchors

    reg_x = jnp.tanh(reg_ref[0, 0]) * wh_ref[0]             # (C, A)
    reg_y = jnp.tanh(reg_ref[0, 1]) * wh_ref[1]
    reg = jnp.stack([reg_x, reg_y], axis=0)                 # (2, C, A)
    anch = anch_ref[...]                                    # (2, C, A)

    pose_ref[0] = jnp.sum(rw[None] * (reg + anch), axis=-1)   # (2, C)
    surr_ref[0] = jnp.sum(rw[None] * anch, axis=-1)
    regout_ref[0] = reg


def a2j_aggregate(classification, regression, anchors, wh, temp):
    """classification: (B, A, C); regression: (B, A, C, 2); anchors: (A, 2); wh: (2,)."""
    B, A, C = classification.shape
    cls_t = jnp.transpose(classification, (0, 2, 1))              # (B, C, A)
    reg_t = jnp.transpose(regression, (0, 3, 2, 1))               # (B, 2, C, A)
    anch_t = jnp.broadcast_to(anchors.T[:, None, :], (2, C, A)).astype(jnp.float32)
    wh_arr = jnp.asarray(wh, jnp.float32).reshape(2)
    temp_arr = jnp.asarray(temp, jnp.float32).reshape(1)

    pose, surr, reg_out = pl.pallas_call(
        _a2j_kernel,
        out_shape=(
            jax.ShapeDtypeStruct((B, 2, C), jnp.float32),
            jax.ShapeDtypeStruct((B, 2, C), jnp.float32),
            jax.ShapeDtypeStruct((B, 2, C, A), jnp.float32),
        ),
        grid_spec=pltpu.PrefetchScalarGridSpec(
            num_scalar_prefetch=0,
            grid=(B,),
            in_specs=[
                pl.BlockSpec((1, C, A), lambda b: (b, 0, 0)),
                pl.BlockSpec((1, 2, C, A), lambda b: (b, 0, 0, 0)),
                pl.BlockSpec((2, C, A), lambda b: (0, 0, 0)),
                pl.BlockSpec(memory_space=pltpu.MemorySpace.SMEM),
                pl.BlockSpec(memory_space=pltpu.MemorySpace.SMEM),
            ],
            out_specs=(
                pl.BlockSpec((1, 2, C), lambda b: (b, 0, 0)),
                pl.BlockSpec((1, 2, C), lambda b: (b, 0, 0)),
                pl.BlockSpec((1, 2, C, A), lambda b: (b, 0, 0, 0)),
            ),
        ),
        compiler_params=pltpu.CompilerParams(dimension_semantics=("parallel",)),
    )(cls_t, reg_t, anch_t, wh_arr, temp_arr)

    pose_pred = jnp.transpose(pose, (0, 2, 1))        # (B, C, 2)
    surrounding = jnp.transpose(surr, (0, 2, 1))      # (B, C, 2)
    reg = jnp.transpose(reg_out, (0, 3, 2, 1))        # (B, A, C, 2)
    return pose_pred, surrounding, reg


# --------------------------------- model assembly ----------------------------------

def avg_pool2x2(x):
    B, H, W, C = x.shape
    return x.reshape(B, H // 2, 2, W // 2, 2, C).mean(axis=(2, 4))


def init_params(key, cfg):
    channels = cfg["CHANNELS"]
    feat = cfg["FEAT"]
    assert channels == feat  # lets the fused head stack all its conv weights
    nA = len(cfg["N_ANCHORS_H"]) * len(cfg["N_ANCHORS_W"])
    C = cfg["NUM_JOINTS"] * 2
    keys = jax.random.split(key, 16)

    def conv_p(k, cin, cout):
        kw, kb = jax.random.split(k)
        w = jax.random.normal(kw, (3, 3, cin, cout), jnp.float32) / np.sqrt(9.0 * cin)
        b = 0.01 * jax.random.normal(kb, (cout,), jnp.float32)
        return w, b

    return {
        # TODO(synk): get_pose_net (full HRNet backbone) is not defined in the provided
        # module; a deterministic 2-branch conv stem stands in for it.
        "backbone_out": conv_p(keys[0], cfg["IN_CHANNELS"], channels),
        "backbone_inter": conv_p(keys[1], cfg["IN_CHANNELS"], channels),
        "down_conv": conv_p(keys[2], channels, channels),          # shared, as in the module
        "reg_convs": [conv_p(keys[3 + i], feat, feat) for i in range(4)],
        "reg_out": conv_p(keys[7], feat, nA * C * 2),
        "cls_convs": [conv_p(keys[8 + i], feat, feat) for i in range(4)],
        "cls_out": conv_p(keys[12], feat, nA * C),
        "temp": jnp.float32(5.0) if cfg["TRAINABLE_SOFTMAX"] else jnp.float32(1.0),
        "wh": jnp.asarray(cfg["INPUT_SIZE"], jnp.float32),
        "all_anchors": jnp.asarray(
            shift([16, 16], 16, generate_anchors(cfg["N_ANCHORS_H"], cfg["N_ANCHORS_W"])),
            jnp.float32),
        "n_anchors": nA,
        "num_classes": C,
    }


def hrnet_a2j_forward(params, x_nhwc):
    # Backbone stub for get_pose_net -> (output_feat, inter_feat)
    output_feat = conv3x3(x_nhwc, *params["backbone_out"], relu=True)
    inter_feat = conv3x3(x_nhwc, *params["backbone_inter"], relu=True)

    def downsample(f):
        f = avg_pool2x2(f)
        f = conv3x3(f, *params["down_conv"], relu=False)
        return avg_pool2x2(f)

    inter_feat = downsample(inter_feat)      # (B, 16, 16, channels)
    output_feat = downsample(output_feat)

    B, Hf, Wf, _ = output_feat.shape
    nA = params["n_anchors"]
    C = params["num_classes"]

    # TODO(synk): ClassificationModel/RegressionModel are external; they are assumed to
    # be 4x (3x3 conv + relu) followed by a 3x3 output conv, the standard A2J heads.
    cls_map = fused_head(inter_feat, params["cls_convs"], *params["cls_out"])    # (B, HW, nA*C)
    reg_map = fused_head(output_feat, params["reg_convs"], *params["reg_out"])   # (B, HW, nA*C*2)

    classification = cls_map.reshape(B, Hf * Wf * nA, C)
    regression = reg_map.reshape(B, Hf * Wf * nA, C, 2)

    pose_pred, surrounding, reg = a2j_aggregate(
        classification, regression, params["all_anchors"], params["wh"], params["temp"])
    return pose_pred, surrounding, classification, reg, params["temp"]


# ------------------------------ plain-JAX reference path ---------------------------

def conv3x3_ref(x, w, b, relu):
    # Same math as the Pallas path: bf16 matmul operands, f32 accumulation, f32 epilogue.
    y = lax.conv_general_dilated(
        x.astype(jnp.bfloat16), w.astype(jnp.bfloat16), (1, 1), "SAME",
        dimension_numbers=("NHWC", "HWIO", "NHWC"),
        preferred_element_type=jnp.float32) + b.astype(jnp.float32)
    return jnp.maximum(y, 0.0) if relu else y


def reference_forward(params, x_nhwc):
    out_f = conv3x3_ref(x_nhwc, *params["backbone_out"], relu=True)
    int_f = conv3x3_ref(x_nhwc, *params["backbone_inter"], relu=True)

    def down(f):
        f = avg_pool2x2(f)
        f = conv3x3_ref(f, *params["down_conv"], relu=False)
        return avg_pool2x2(f)

    int_f, out_f = down(int_f), down(out_f)

    def head(f, convs, ow, ob):
        for w, b in convs:
            f = conv3x3_ref(f, w, b, relu=True)
        return conv3x3_ref(f, ow, ob, relu=False)

    B, Hf, Wf, _ = out_f.shape
    nA = params["n_anchors"]
    C = params["num_classes"]
    cls = head(int_f, params["cls_convs"], *params["cls_out"]).reshape(B, Hf * Wf * nA, C)
    regr = head(out_f, params["reg_convs"], *params["reg_out"]).reshape(B, Hf * Wf * nA, C, 2)

    reg = jnp.tanh(regr) * params["wh"].reshape(1, 1, 1, 2)
    rw = jax.nn.softmax(cls * params["temp"], axis=1)[..., None]
    anch = params["all_anchors"][None, :, None, :]
    pose = jnp.sum(rw * (reg + anch), axis=1)
    surr = jnp.sum(rw * anch, axis=1)
    return pose, surr, cls, reg


# -------------------------------------- main ---------------------------------------

if __name__ == "__main__":
    cfg = dict(
        IN_CHANNELS=3, INPUT_HW=64, CHANNELS=32, FEAT=32,
        N_ANCHORS_H=(2.0, 6.0), N_ANCHORS_W=(2.0, 6.0),
        NUM_JOINTS=8, INPUT_SIZE=(64.0, 64.0), TRAINABLE_SOFTMAX=True,
    )
    key = jax.random.PRNGKey(0)
    kx, kp = jax.random.split(key)
    x_nchw = jax.random.normal(
        kx, (2, cfg["IN_CHANNELS"], cfg["INPUT_HW"], cfg["INPUT_HW"]), jnp.float32)
    params = init_params(kp, cfg)

    x_nhwc = jnp.transpose(x_nchw, (0, 2, 3, 1))
    pose_pred, surrounding, classification, reg, temp = hrnet_a2j_forward(params, x_nhwc)
    jax.block_until_ready((pose_pred, surrounding, classification, reg))

    # --- sanity check 1: one Pallas im2col conv vs XLA conv (identical bf16 inputs) ---
    w, b = params["backbone_out"]
    conv_ref = conv3x3_ref(x_nhwc, w, b, relu=True)
    conv_ker = conv3x3(x_nhwc, w, b, relu=True)
    np.testing.assert_allclose(np.asarray(conv_ker), np.asarray(conv_ref), rtol=2e-2, atol=2e-2)

    # --- sanity check 2: full forward vs an independent plain-JAX reference ---
    pose_ref, surr_ref, cls_ref, reg_ref = reference_forward(params, x_nhwc)
    np.testing.assert_allclose(np.asarray(classification), np.asarray(cls_ref),
                               rtol=1e-2, atol=2e-2)
    np.testing.assert_allclose(np.asarray(reg), np.asarray(reg_ref), rtol=2e-2, atol=2e-1)
    np.testing.assert_allclose(np.asarray(pose_pred), np.asarray(pose_ref), rtol=2e-2, atol=2e-1)
    np.testing.assert_allclose(np.asarray(surrounding), np.asarray(surr_ref),
                               rtol=2e-2, atol=2e-1)

    assert pose_pred.shape == (2, cfg["NUM_JOINTS"] * 2, 2)
    assert surrounding.shape == (2, cfg["NUM_JOINTS"] * 2, 2)
    assert classification.shape == (2, 16 * 16 * 4, cfg["NUM_JOINTS"] * 2)
    assert reg.shape == (2, 16 * 16 * 4, cfg["NUM_JOINTS"] * 2, 2)

    print("KERNEL_OK")
</pallas_src>

<mosaic_0001>
module attributes {stable_mosaic.version = 11 : i64} {
  func.func @_conv_mm_kernel(%arg0: i32, %arg1: i32, %arg2: memref<1x1024x27xbf16, #tpu.memory_space<vmem>>, %arg3: memref<27x32xbf16, #tpu.memory_space<vmem>>, %arg4: memref<1x32xf32, #tpu.memory_space<vmem>>, %arg5: memref<1x1024x32xf32, #tpu.memory_space<vmem>>) attributes {dimension_semantics = [#tpu.dimension_semantics<parallel>, #tpu.dimension_semantics<parallel>], iteration_bounds = array<i64: 2, 4>, scalar_prefetch = 0 : i64, scratch_operands = 0 : i64, tpu.core_type = #tpu.core_type<tc>, window_params = [{transform_indices = @transform_0, window_bounds = array<i64: 1, 1024, 27>}, {pipeline_mode = #tpu.pipeline_mode<synchronous>, transform_indices = @transform_1, window_bounds = array<i64: 27, 32>}, {pipeline_mode = #tpu.pipeline_mode<synchronous>, transform_indices = @transform_2, window_bounds = array<i64: 1, 32>}, {transform_indices = @transform_3, window_bounds = array<i64: 1, 1024, 32>}]} {
    %c0 = arith.constant 0 : index
    %c0_0 = arith.constant 0 : index
    %c0_1 = arith.constant 0 : index
    %0 = vector.load %arg2[%c0, %c0_0, %c0_1] : memref<1x1024x27xbf16, #tpu.memory_space<vmem>>, vector<1x1024x27xbf16>
    %1 = vector.shape_cast %0 : vector<1x1024x27xbf16> to vector<1024x27xbf16>
    %c0_2 = arith.constant 0 : index
    %c0_3 = arith.constant 0 : index
    %2 = vector.load %arg3[%c0_2, %c0_3] : memref<27x32xbf16, #tpu.memory_space<vmem>>, vector<27x32xbf16>
    %cst = arith.constant dense<0.000000e+00> : vector<1024x32xf32>
    %3 = tpu.matmul %1, %2, %cst {dimension_numbers = #tpu.dot_dimension_numbers<[1], [0], [0], [1], [0, 0, 1, 1], [], []>} : vector<1024x27xbf16>, vector<27x32xbf16>, vector<1024x32xf32> -> vector<1024x32xf32>
    %c0_4 = arith.constant 0 : index
    %c0_5 = arith.constant 0 : index
    %4 = vector.load %arg4[%c0_4, %c0_5] : memref<1x32xf32, #tpu.memory_space<vmem>>, vector<1x32xf32>
    %5 = vector.broadcast %4 : vector<1x32xf32> to vector<1024x32xf32>
    %6 = arith.addf %3, %5 : vector<1024x32xf32>
    %cst_6 = arith.constant 0.000000e+00 : f32
    %7 = vector.broadcast %cst_6 : f32 to vector<1024x32xf32>
    %8 = arith.maximumf %6, %7 : vector<1024x32xf32>
    %c0_7 = arith.constant 0 : index
    %c0_8 = arith.constant 0 : index
    %c0_9 = arith.constant 0 : index
    %9 = vector.load %arg5[%c0_7, %c0_8, %c0_9] : memref<1x1024x32xf32, #tpu.memory_space<vmem>>, vector<1x1024x32xf32>
    %10 = vector.shape_cast %9 : vector<1x1024x32xf32> to vector<1024x32xf32>
    %11 = vector.shape_cast %8 : vector<1024x32xf32> to vector<1x1024x32xf32>
    tpu.vector_store %arg5[%c0_7, %c0_8, %c0_9], %11 {strides = array<i32>} : memref<1x1024x32xf32, #tpu.memory_space<vmem>>, vector<1x1024x32xf32>,
    return
  }
  func.func @transform_0(%arg0: i32, %arg1: i32) -> (i32, i32, i32) {
    %c0_i32 = arith.constant 0 : i32
    %c0_i32_0 = arith.constant 0 : i32
    return %arg0, %arg1, %c0_i32 : i32, i32, i32
  }
  func.func @transform_1(%arg0: i32, %arg1: i32) -> (i32, i32) {
    %c0_i32 = arith.constant 0 : i32
    %c0_i32_0 = arith.constant 0 : i32
    %c0_i32_1 = arith.constant 0 : i32
    return %c0_i32, %c0_i32_0 : i32, i32
  }
  func.func @transform_2(%arg0: i32, %arg1: i32) -> (i32, i32) {
    %c0_i32 = arith.constant 0 : i32
    %c0_i32_0 = arith.constant 0 : i32
    %c0_i32_1 = arith.constant 0 : i32
    return %c0_i32, %c0_i32_0 : i32, i32
  }
  func.func @transform_3(%arg0: i32, %arg1: i32) -> (i32, i32, i32) {
    %c0_i32 = arith.constant 0 : i32
    %c0_i32_0 = arith.constant 0 : i32
    return %arg0, %arg1, %c0_i32 : i32, i32, i32
  }
}

</mosaic_0001>

<llo_original>
// kernel: tpu_custom_call.1
$region0: #{tpu_custom_call.1}
  #allocation0 [shape = 'u32[]', space=smem, size = 0x4, offset = 0x4, fixed_abs, tag = 'smem constant byte address 0x4 - core index']
  #allocation1 [shape = 'u32[72,128]{1,0:T(1,128)}', space=vmem, size = 0x9000, scoped, tag = 'internal scratch']
  %s0 = inlined_call_operand.vmem [shape: bf16[2,4096,27], index: 0, kind: input, shape index: {}]
  %s1 = inlined_call_operand.hbm [shape: bf16[27,32], index: 1, kind: input, shape index: {}]
  %s2 = inlined_call_operand.hbm [shape: f32[1,32], index: 2, kind: input, shape index: {}]
  %s3 = inlined_call_operand.vmem [shape: f32[2,4096,32], index: 3, kind: output, shape index: {}]
  %s4 = sld [smem:[#allocation0]]
  $region53: #{tpu_custom_call.1} parent=0
    _
  %s6 = ssub.s32 1, %s4
  %s7 = scalar_select 0, %s6, %s4
  $region1: #{tpu_custom_call.1} parent=0
    #allocation2 [shape = 'u8[8192]{0}', space=vmem, size = 0x2000, scoped, tag = 'input window, operand 1, single buffered']
    #allocation3 [shape = 's32[2]{0}', space=sflag, size = 0x8, scoped, tag = 'scoped memory for tpu_custom_call.1']
    #allocation4 [shape = 'u8[512]{0}', space=vmem, size = 0x400, scoped, tag = 'input window, operand 2, single buffered']
    #allocation5 [shape = 's32[1]{0}', space=sflag, size = 0x4, scoped, tag = 'scoped memory for tpu_custom_call.1']
    %8 = vsyncpa [#allocation3], 0
    %9 = vsyncpa [#allocation5], 0
    loop: start=0, step=1, limit=10
    $region2: #{tpu_custom_call.1} parent=1 // loop_pre_header
      _
    $region3: #{tpu_custom_call.1} parent=1 // loop_header
      %s11 = sphi 0, %s15
      %p12 = scmp.ge.s32.totalorder %s11, 10
      %s18 = sphi 0, %s30
      %s19 = sphi 0, %s26
      %s20 = sphi 0, %s18
      %s21 = sphi 0, %s19
      %s22 = sphi 0, %s20
      %s23 = sphi 0, %s21
      %s35 = sphi 0, %s37
      %s38 = sphi 0, %s35
      %s39 = sphi 0, %s38
      %s55 = sphi 0, %s39
      %s59 = sphi 0, %s59
      %s61 = sphi 0, %s59
      %s62 = sphi 0, %s61
      %s76 = sphi 0, %s62
      %s80 = sphi 0, %s80
      %s82 = sphi 0, %s80
      %s83 = sphi 0, %s82
      %s97 = sphi 0, %s83
      %s105 = sphi 0, %s107
      %s108 = sphi 0, %s105
      %s109 = sphi 0, %s108
      %s125 = sphi 0, %s109
    $region4: #{tpu_custom_call.1} parent=1 // loop_header_branch
      %14 = sbr.rel (%p12) target = $region8
    $region5: #{tpu_custom_call.1} parent=1 // loop_body
      %s16 = ssub.s32 %s11, 1
      %s17 = ssub.s32 %s11, 2
      %s24 = sadd.s32 1, %s19
      %p25 = scmp.ge.s32.totalorder %s24, 4
      %s26 = scalar_select %p25, 0, %s24
      %s27 = sadd.s32 1, %s18
      %s28 = scalar_select %p25, %s27, %s18
      %p29 = scmp.ge.s32.totalorder %s28, 2
      %s30 = scalar_select %p29, 0, %s28
      %s31 = ssub.s32 %s18, %s30
      %s32 = ssub.s32 %s19, %s26
      %s33 = sor.u32 %s31, %s32
      %p34 = scmp.eq.s32.totalorder %s33, 0
      %s36 = sadd.s32 %s35, 1
      %s37 = scalar_select %p34, %s35, %s36
      %p40 = pneg %p34
      %p41 = scmp.eq.s32.totalorder %s11, 7
      %p42 = por %p40, %p41
      %p43 = scmp.ne.s32.totalorder %s35, %s38
      %p44 = scmp.eq.s32.totalorder %s11, 0
      %p45 = por %p43, %p44
      %p46 = scmp.ne.s32.totalorder %s35, %s38
      %p47 = scmp.eq.s32.totalorder %s16, 7
      %p48 = por %p46, %p47
      %p49 = scmp.ne.s32.totalorder %s38, %s39
      %p50 = scmp.eq.s32.totalorder %s16, 0
      %p51 = por %p49, %p50
      %p52 = scmp.ne.s32.totalorder %s38, %s39
      %p53 = scmp.eq.s32.totalorder %s17, 7
      %p54 = por %p52, %p53
      %p56 = scmp.ne.s32.totalorder %s39, %s55
      %p57 = scmp.eq.s32.totalorder %s17, 0
      %p58 = por %p56, %p57
      %s60 = sadd.s32 %s59, 1
      %p63 = scmp.eq.s32.totalorder %s11, 7
      %p64 = scmp.ne.s32.totalorder %s59, %s61
      %p65 = scmp.eq.s32.totalorder %s11, 0
      %p66 = por %p64, %p65
      %p67 = scmp.ne.s32.totalorder %s59, %s61
      %p68 = scmp.eq.s32.totalorder %s16, 7
      %p69 = por %p67, %p68
      %p70 = scmp.ne.s32.totalorder %s61, %s62
      %p71 = scmp.eq.s32.totalorder %s16, 0
      %p72 = por %p70, %p71
      %p73 = scmp.ne.s32.totalorder %s61, %s62
      %p74 = scmp.eq.s32.totalorder %s17, 7
      %p75 = por %p73, %p74
      %p77 = scmp.ne.s32.totalorder %s62, %s76
      %p78 = scmp.eq.s32.totalorder %s17, 0
      %p79 = por %p77, %p78
      %s81 = sadd.s32 %s80, 1
      %p84 = scmp.eq.s32.totalorder %s11, 7
      %p85 = scmp.ne.s32.totalorder %s80, %s82
      %p86 = scmp.eq.s32.totalorder %s11, 0
      %p87 = por %p85, %p86
      %p88 = scmp.ne.s32.totalorder %s80, %s82
      %p89 = scmp.eq.s32.totalorder %s16, 7
      %p90 = por %p88, %p89
      %p91 = scmp.ne.s32.totalorder %s82, %s83
      %p92 = scmp.eq.s32.totalorder %s16, 0
      %p93 = por %p91, %p92
      %p94 = scmp.ne.s32.totalorder %s82, %s83
      %p95 = scmp.eq.s32.totalorder %s17, 7
      %p96 = por %p94, %p95
      %p98 = scmp.ne.s32.totalorder %s83, %s97
      %p99 = scmp.eq.s32.totalorder %s17, 0
      %p100 = por %p98, %p99
      %s101 = ssub.s32 %s18, %s30
      %s102 = ssub.s32 %s19, %s26
      %s103 = sor.u32 %s101, %s102
      %p104 = scmp.eq.s32.totalorder %s103, 0
      %s106 = sadd.s32 %s105, 1
      %s107 = scalar_select %p104, %s105, %s106
      %p110 = pneg %p104
      %p111 = scmp.eq.s32.totalorder %s11, 7
      %p112 = por %p110, %p111
      %p113 = scmp.ne.s32.totalorder %s105, %s108
      %p114 = scmp.eq.s32.totalorder %s11, 0
      %p115 = por %p113, %p114
      %p116 = scmp.ne.s32.totalorder %s105, %s108
      %p117 = scmp.eq.s32.totalorder %s16, 7
      %p118 = por %p116, %p117
      %p119 = scmp.ne.s32.totalorder %s108, %s109
      %p120 = scmp.eq.s32.totalorder %s16, 0
      %p121 = por %p119, %p120
      %p122 = scmp.ne.s32.totalorder %s108, %s109
      %p123 = scmp.eq.s32.totalorder %s17, 7
      %p124 = por %p122, %p123
      %p126 = scmp.ne.s32.totalorder %s109, %s125
      %p127 = scmp.eq.s32.totalorder %s17, 0
      %p128 = por %p126, %p127
      %p129 = scmp.le.s32.totalorder 1, %s11
      %p130 = scmp.lt.s32.totalorder %s11, 9
      %p131 = pnand %p129, %p130
      %p132 = pneg %p131
      // Predicated region
      $region9: #{tpu_custom_call.1} parent=5 // pred_check
        _
      $region10: #{tpu_custom_call.1} parent=5 // pred_check_branch
        %134 = sbr.rel (%p131) target = $region12
      $region11: #{tpu_custom_call.1} parent=5 // pred_region
        %s135 = ssub.s32 %s11, 1
        // Predicated region
        $region13: #{tpu_custom_call.1} parent=11 // pred_check
          %p136 = pneg %p72
        $region14: #{tpu_custom_call.1} parent=11 // pred_check_branch
          %138 = sbr.rel (%p136) target = $region16
        $region15: #{tpu_custom_call.1} parent=11 // pred_region
          %140 = vsyncadd [#allocation3], 0
          %s141 = sshll.u32 %s1, 4
          %s142 = int_to_ptr.hbm [resolvable:$true] %s141
          %s143 = sshll.u32 [#allocation2], 4
          %s144 = int_to_ptr.vmem [resolvable:$true] %s143
          %149 = dma.hbm_to_vmem [thread:$0]  %s142, 256, %s144, [#allocation3], 64, 64, 4
        $region16: #{tpu_custom_call.1} parent=11 // pred_fallthru
          _
        // Predicated region
        $region17: #{tpu_custom_call.1} parent=11 // pred_check
          %p150 = pneg %p93
        $region18: #{tpu_custom_call.1} parent=11 // pred_check_branch
          %152 = sbr.rel (%p150) target = $region20
        $region19: #{tpu_custom_call.1} parent=11 // pred_region
          %154 = vsyncadd [#allocation5], 0
          %s156 = sshll.u32 %s2, 4
          %s157 = int_to_ptr.hbm [resolvable:$true] %s156
          %s158 = sshll.u32 [#allocation4], 4
          %s159 = int_to_ptr.vmem [resolvable:$true] %s158
          %161 = dma.hbm_to_vmem [thread:$0]  %s157, 16, %s159, [#allocation5]
        $region20: #{tpu_custom_call.1} parent=11 // pred_fallthru
          _
      $region12: #{tpu_custom_call.1} parent=5 // pred_fallthru
        _
      %p162 = scmp.lt.s32.totalorder %s11, 8
      // Predicated region
      $region21: #{tpu_custom_call.1} parent=5 // pred_check
        %p163 = pneg %p162
      $region22: #{tpu_custom_call.1} parent=5 // pred_check_branch
        %165 = sbr.rel (%p163) target = $region24
      $region23: #{tpu_custom_call.1} parent=5 // pred_region
        // Predicated region
        $region25: #{tpu_custom_call.1} parent=23 // pred_check
          %p166 = pneg %p45
        $region26: #{tpu_custom_call.1} parent=23 // pred_check_branch
          %168 = sbr.rel (%p166) target = $region28
        $region27: #{tpu_custom_call.1} parent=23 // pred_region
          %s169 = smul.u32 128, %s19
          %p170 = scmp.lt.s32.totalorder %s18, 1
          %s171 = scalar_select %p170, %s18, 1
          %p172 = scmp.lt.s32.totalorder %s169, 511
          %s173 = scalar_select %p172, %s169, 511
          %s174 = smul.addr %s171, 512
          %s175 = sadd.s32 %s173, %s174
          %s176 = smul.addr %s175, 4
          %s177 = scalar_lea.vmem %s0, %s176
          %s178 = smul.u32 128, %s19
        $region28: #{tpu_custom_call.1} parent=23 // pred_fallthru
          _
      $region24: #{tpu_custom_call.1} parent=5 // pred_fallthru
        _
      %p179 = scmp.le.s32.totalorder 1, %s11
      %p180 = scmp.lt.s32.totalorder %s11, 9
      %p181 = pnand %p179, %p180
      %p182 = pneg %p181
      // Predicated region
      $region29: #{tpu_custom_call.1} parent=5 // pred_check
        _
      $region30: #{tpu_custom_call.1} parent=5 // pred_check_branch
        %184 = sbr.rel (%p181) target = $region32
      $region31: #{tpu_custom_call.1} parent=5 // pred_region
        %s185 = ssub.s32 %s11, 1
        // Predicated region
        $region33: #{tpu_custom_call.1} parent=31 // pred_check
          %p186 = pneg %p72
        $region34: #{tpu_custom_call.1} parent=31 // pred_check_branch
          %188 = sbr.rel (%p186) target = $region36
        $region35: #{tpu_custom_call.1} parent=31 // pred_region
          %190 = dma.done [#allocation3], 256
        $region36: #{tpu_custom_call.1} parent=31 // pred_fallthru
          _
        // Predicated region
        $region37: #{tpu_custom_call.1} parent=31 // pred_check
          %p191 = pneg %p93
        $region38: #{tpu_custom_call.1} parent=31 // pred_check_branch
          %193 = sbr.rel (%p191) target = $region40
        $region39: #{tpu_custom_call.1} parent=31 // pred_region
          %195 = dma.done [#allocation5], 16
        $region40: #{tpu_custom_call.1} parent=31 // pred_fallthru
          _
        %s196 = smul.u32 128, %s21
        %p197 = scmp.lt.s32.totalorder %s20, 1
        %s198 = scalar_select %p197, %s20, 1
        %p199 = scmp.lt.s32.totalorder %s196, 511
        %s200 = scalar_select %p199, %s196, 511
        %s201 = smul.addr %s198, 512
        %s202 = sadd.s32 %s200, %s201
        %s203 = smul.addr %s202, 4
        %s204 = scalar_lea.vmem %s0, %s203
        %p205 = pneg %p51
        %p206 = pneg %p48
        %p207 = pneg %p72
        %p208 = pneg %p69
        %p209 = pneg %p93
        %p210 = pneg %p90
        %p211 = pneg %p121
        %p212 = pneg %p118
        %s213 = smul.u32 128, %s21
        %p214 = scmp.lt.s32.totalorder %s20, 1
        %s215 = scalar_select %p214, %s20, 1
        %p216 = scmp.lt.s32.totalorder %s213, 511
        %s217 = scalar_select %p216, %s213, 511
        %s218 = smul.addr %s215, 512
        %s219 = sadd.s32 %s217, %s218
        %s220 = smul.addr %s219, 8
        %s221 = scalar_lea.vmem %s3, %s220
        %s222 = smul.u32 128, %s21
        %p223 = scmp.lt.s32.totalorder %s20, 1
        %s224 = scalar_select %p223, %s20, 1
        %p225 = scmp.lt.s32.totalorder %s222, 511
        %s226 = scalar_select %p225, %s222, 511
        %s227 = smul.addr %s224, 512
        %s228 = sadd.s32 %s226, %s227
        %s229 = smul.addr %s228, 4
        %s230 = scalar_lea.vmem %s0, %s229
        %s231 = smul.u32 128, %s21
        %s232 = smul.u32 128, %s21
        %p233 = scmp.lt.s32.totalorder %s20, 1
        %s234 = scalar_select %p233, %s20, 1
        %p235 = scmp.lt.s32.totalorder %s232, 511
        %s236 = scalar_select %p235, %s232, 511
        %s237 = smul.addr %s234, 512
        %s238 = sadd.s32 %s236, %s237
        %s239 = smul.addr %s238, 8
        %s240 = scalar_lea.vmem %s3, %s239
        %s241 = smul.u32 128, %s21
        %v243 = vld [vmem:[%s230] sm:$0xf]
        %v244 = vld [vmem:[%s230 + $0x4] sm:$0xf]
        %v245 = vld [vmem:[%s230 + $0x8] sm:$0xf]
        %v246 = vld [vmem:[%s230 + $0xc] sm:$0xf]
        %v247 = vld [vmem:[%s230 + $0x10] sm:$0xf]
        %v248 = vld [vmem:[%s230 + $0x14] sm:$0xf]
        %v249 = vld [vmem:[%s230 + $0x18] sm:$0xf]
        %v250 = vld [vmem:[%s230 + $0x1c] sm:$0xf]
        %v251 = vld [vmem:[%s230 + $0x20] sm:$0xf]
        %v252 = vld [vmem:[%s230 + $0x24] sm:$0xf]
        %v253 = vld [vmem:[%s230 + $0x28] sm:$0xf]
        %v254 = vld [vmem:[%s230 + $0x2c] sm:$0xf]
        %v255 = vld [vmem:[%s230 + $0x30] sm:$0xf]
        %v256 = vld [vmem:[%s230 + $0x34] sm:$0xf]
        %v257 = vld [vmem:[%s230 + $0x38] sm:$0xf]
        %v258 = vld [vmem:[%s230 + $0x3c] sm:$0xf]
        %v259 = vld [vmem:[%s230 + $0x40] sm:$0xf]
        %v260 = vld [vmem:[%s230 + $0x44] sm:$0xf]
        %v261 = vld [vmem:[%s230 + $0x48] sm:$0xf]
        %v262 = vld [vmem:[%s230 + $0x4c] sm:$0xf]
        %v263 = vld [vmem:[%s230 + $0x50] sm:$0xf]
        %v264 = vld [vmem:[%s230 + $0x54] sm:$0xf]
        %v265 = vld [vmem:[%s230 + $0x58] sm:$0xf]
        %v266 = vld [vmem:[%s230 + $0x5c] sm:$0xf]
        %v267 = vld [vmem:[%s230 + $0x60] sm:$0xf]
        %v268 = vld [vmem:[%s230 + $0x64] sm:$0xf]
        %v269 = vld [vmem:[%s230 + $0x68] sm:$0xf]
        %v270 = vld [vmem:[%s230 + $0x6c] sm:$0xf]
        %v271 = vld [vmem:[%s230 + $0x70] sm:$0xf]
        %v272 = vld [vmem:[%s230 + $0x74] sm:$0xf]
        %v273 = vld [vmem:[%s230 + $0x78] sm:$0xf]
        %v274 = vld [vmem:[%s230 + $0x7c] sm:$0xf]
        %v275 = vld [vmem:[%s230 + $0x80] sm:$0xf]
        %v276 = vld [vmem:[%s230 + $0x84] sm:$0xf]
        %v277 = vld [vmem:[%s230 + $0x88] sm:$0xf]
        %v278 = vld [vmem:[%s230 + $0x8c] sm:$0xf]
        %v279 = vld [vmem:[%s230 + $0x90] sm:$0xf]
        %v280 = vld [vmem:[%s230 + $0x94] sm:$0xf]
        %v281 = vld [vmem:[%s230 + $0x98] sm:$0xf]
        %v282 = vld [vmem:[%s230 + $0x9c] sm:$0xf]
        %v283 = vld [vmem:[%s230 + $0xa0] sm:$0xf]
        %v284 = vld [vmem:[%s230 + $0xa4] sm:$0xf]
        %v285 = vld [vmem:[%s230 + $0xa8] sm:$0xf]
        %v286 = vld [vmem:[%s230 + $0xac] sm:$0xf]
        %v287 = vld [vmem:[%s230 + $0xb0] sm:$0xf]
        %v288 = vld [vmem:[%s230 + $0xb4] sm:$0xf]
        %v289 = vld [vmem:[%s230 + $0xb8] sm:$0xf]
        %v290 = vld [vmem:[%s230 + $0xbc] sm:$0xf]
        %v291 = vld [vmem:[%s230 + $0xc0] sm:$0xf]
        %v292 = vld [vmem:[%s230 + $0xc4] sm:$0xf]
        %v293 = vld [vmem:[%s230 + $0xc8] sm:$0xf]
        %v294 = vld [vmem:[%s230 + $0xcc] sm:$0xf]
        %v295 = vld [vmem:[%s230 + $0xd0] sm:$0xf]
        %v296 = vld [vmem:[%s230 + $0xd4] sm:$0xf]
        %v297 = vld [vmem:[%s230 + $0xd8] sm:$0xf]
        %v298 = vld [vmem:[%s230 + $0xdc] sm:$0xf]
        %v299 = vld [vmem:[%s230 + $0xe0] sm:$0xf]
        %v300 = vld [vmem:[%s230 + $0xe4] sm:$0xf]
        %v301 = vld [vmem:[%s230 + $0xe8] sm:$0xf]
        %v302 = vld [vmem:[%s230 + $0xec] sm:$0xf]
        %v303 = vld [vmem:[%s230 + $0xf0] sm:$0xf]
        %v304 = vld [vmem:[%s230 + $0xf4] sm:$0xf]
        %v305 = vld [vmem:[%s230 + $0xf8] sm:$0xf]
        %v306 = vld [vmem:[%s230 + $0xfc] sm:$0xf]
        %v307 = vld [vmem:[%s230 + $0x100] sm:$0xf]
        %v308 = vld [vmem:[%s230 + $0x104] sm:$0xf]
        %v309 = vld [vmem:[%s230 + $0x108] sm:$0xf]
        %v310 = vld [vmem:[%s230 + $0x10c] sm:$0xf]
        %v311 = vld [vmem:[%s230 + $0x110] sm:$0xf]
        %v312 = vld [vmem:[%s230 + $0x114] sm:$0xf]
        %v313 = vld [vmem:[%s230 + $0x118] sm:$0xf]
        %v314 = vld [vmem:[%s230 + $0x11c] sm:$0xf]
        %v315 = vld [vmem:[%s230 + $0x120] sm:$0xf]
        %v316 = vld [vmem:[%s230 + $0x124] sm:$0xf]
        %v317 = vld [vmem:[%s230 + $0x128] sm:$0xf]
        %v318 = vld [vmem:[%s230 + $0x12c] sm:$0xf]
        %v319 = vld [vmem:[%s230 + $0x130] sm:$0xf]
        %v320 = vld [vmem:[%s230 + $0x134] sm:$0xf]
        %v321 = vld [vmem:[%s230 + $0x138] sm:$0xf]
        %v322 = vld [vmem:[%s230 + $0x13c] sm:$0xf]
        %v323 = vld [vmem:[%s230 + $0x140] sm:$0xf]
        %v324 = vld [vmem:[%s230 + $0x144] sm:$0xf]
        %v325 = vld [vmem:[%s230 + $0x148] sm:$0xf]
        %v326 = vld [vmem:[%s230 + $0x14c] sm:$0xf]
        %v327 = vld [vmem:[%s230 + $0x150] sm:$0xf]
        %v328 = vld [vmem:[%s230 + $0x154] sm:$0xf]
        %v329 = vld [vmem:[%s230 + $0x158] sm:$0xf]
        %v330 = vld [vmem:[%s230 + $0x15c] sm:$0xf]
        %v331 = vld [vmem:[%s230 + $0x160] sm:$0xf]
        %v332 = vld [vmem:[%s230 + $0x164] sm:$0xf]
        %v333 = vld [vmem:[%s230 + $0x168] sm:$0xf]
        %v334 = vld [vmem:[%s230 + $0x16c] sm:$0xf]
        %v335 = vld [vmem:[%s230 + $0x170] sm:$0xf]
        %v336 = vld [vmem:[%s230 + $0x174] sm:$0xf]
        %v337 = vld [vmem:[%s230 + $0x178] sm:$0xf]
        %v338 = vld [vmem:[%s230 + $0x17c] sm:$0xf]
        %v339 = vld [vmem:[%s230 + $0x180] sm:$0xf]
        %v340 = vld [vmem:[%s230 + $0x184] sm:$0xf]
        %v341 = vld [vmem:[%s230 + $0x188] sm:$0xf]
        %v342 = vld [vmem:[%s230 + $0x18c] sm:$0xf]
        %v343 = vld [vmem:[%s230 + $0x190] sm:$0xf]
        %v344 = vld [vmem:[%s230 + $0x194] sm:$0xf]
        %v345 = vld [vmem:[%s230 + $0x198] sm:$0xf]
        %v346 = vld [vmem:[%s230 + $0x19c] sm:$0xf]
        %v347 = vld [vmem:[%s230 + $0x1a0] sm:$0xf]
        %v348 = vld [vmem:[%s230 + $0x1a4] sm:$0xf]
        %v349 = vld [vmem:[%s230 + $0x1a8] sm:$0xf]
        %v350 = vld [vmem:[%s230 + $0x1ac] sm:$0xf]
        %v351 = vld [vmem:[%s230 + $0x1b0] sm:$0xf]
        %v352 = vld [vmem:[%s230 + $0x1b4] sm:$0xf]
        %v353 = vld [vmem:[%s230 + $0x1b8] sm:$0xf]
        %v354 = vld [vmem:[%s230 + $0x1bc] sm:$0xf]
        %v355 = vld [vmem:[%s230 + $0x1c0] sm:$0xf]
        %v356 = vld [vmem:[%s230 + $0x1c4] sm:$0xf]
        %v357 = vld [vmem:[%s230 + $0x1c8] sm:$0xf]
        %v358 = vld [vmem:[%s230 + $0x1cc] sm:$0xf]
        %v359 = vld [vmem:[%s230 + $0x1d0] sm:$0xf]
        %v360 = vld [vmem:[%s230 + $0x1d4] sm:$0xf]
        %v361 = vld [vmem:[%s230 + $0x1d8] sm:$0xf]
        %v362 = vld [vmem:[%s230 + $0x1dc] sm:$0xf]
        %v363 = vld [vmem:[%s230 + $0x1e0] sm:$0xf]
        %v364 = vld [vmem:[%s230 + $0x1e4] sm:$0xf]
        %v365 = vld [vmem:[%s230 + $0x1e8] sm:$0xf]
        %v366 = vld [vmem:[%s230 + $0x1ec] sm:$0xf]
        %v367 = vld [vmem:[%s230 + $0x1f0] sm:$0xf]
        %v368 = vld [vmem:[%s230 + $0x1f4] sm:$0xf]
        %v369 = vld [vmem:[%s230 + $0x1f8] sm:$0xf]
        %v370 = vld [vmem:[%s230 + $0x1fc] sm:$0xf]
        %v371 = vld [vmem:[#allocation2] sm:$0xf]
        %v372 = vld [vmem:[#allocation2 + $0x4] sm:$0xf]
        %v373 = vld [vmem:[#allocation2 + $0x8] sm:$0xf]
        %v374 = vld [vmem:[#allocation2 + $0xc] sm:$0x3]
        %v375 = vld [vmem:[#allocation4] sm:$0x1]
        %v377 = vperm.slane %v375, 0
        %v507 = vunpack.c.l.b16 %v243
        %v508 = vunpack.c.l.b16 %v244
        %v509 = vunpack.c.l.b16 %v245
        %v510 = vunpack.c.l.b16 %v246
        %v511 = vunpack.c.l.b16 %v247
        %v512 = vunpack.c.l.b16 %v248
        %v513 = vunpack.c.l.b16 %v249
        %v514 = vunpack.c.l.b16 %v250
        %v515 = vunpack.c.l.b16 %v251
        %v516 = vunpack.c.l.b16 %v252
        %v517 = vunpack.c.l.b16 %v253
        %v518 = vunpack.c.l.b16 %v254
        %v519 = vunpack.c.l.b16 %v255
        %v520 = vunpack.c.l.b16 %v256
        %v521 = vunpack.c.l.b16 %v257
        %v522 = vunpack.c.l.b16 %v258
        %v523 = vunpack.c.l.b16 %v259
        %v524 = vunpack.c.l.b16 %v260
        %v525 = vunpack.c.l.b16 %v261
        %v526 = vunpack.c.l.b16 %v262
        %v527 = vunpack.c.l.b16 %v263
        %v528 = vunpack.c.l.b16 %v264
        %v529 = vunpack.c.l.b16 %v265
        %v530 = vunpack.c.l.b16 %v266
        %v531 = vunpack.c.l.b16 %v267
        %v532 = vunpack.c.l.b16 %v268
        %v533 = vunpack.c.l.b16 %v269
        %v534 = vunpack.c.l.b16 %v270
        %v535 = vunpack.c.l.b16 %v271
        %v536 = vunpack.c.l.b16 %v272
        %v537 = vunpack.c.l.b16 %v273
        %v538 = vunpack.c.l.b16 %v274
        %v539 = vunpack.c.l.b16 %v275
        %v540 = vunpack.c.l.b16 %v276
        %v541 = vunpack.c.l.b16 %v277
        %v542 = vunpack.c.l.b16 %v278
        %v543 = vunpack.c.l.b16 %v279
        %v544 = vunpack.c.l.b16 %v280
        %v545 = vunpack.c.l.b16 %v281
        %v546 = vunpack.c.l.b16 %v282
        %v547 = vunpack.c.l.b16 %v283
        %v548 = vunpack.c.l.b16 %v284
        %v549 = vunpack.c.l.b16 %v285
        %v550 = vunpack.c.l.b16 %v286
        %v551 = vunpack.c.l.b16 %v287
        %v552 = vunpack.c.l.b16 %v288
        %v553 = vunpack.c.l.b16 %v289
        %v554 = vunpack.c.l.b16 %v290
        %v555 = vunpack.c.l.b16 %v291
        %v556 = vunpack.c.l.b16 %v292
        %v557 = vunpack.c.l.b16 %v293
        %v558 = vunpack.c.l.b16 %v294
        %v559 = vunpack.c.l.b16 %v295
        %v560 = vunpack.c.l.b16 %v296
        %v561 = vunpack.c.l.b16 %v297
        %v562 = vunpack.c.l.b16 %v298
        %v563 = vunpack.c.l.b16 %v299
        %v564 = vunpack.c.l.b16 %v300
        %v565 = vunpack.c.l.b16 %v301
        %v566 = vunpack.c.l.b16 %v302
        %v567 = vunpack.c.l.b16 %v303
        %v568 = vunpack.c.l.b16 %v304
        %v569 = vunpack.c.l.b16 %v305
        %v570 = vunpack.c.l.b16 %v306
        %v571 = vunpack.c.l.b16 %v307
        %v572 = vunpack.c.l.b16 %v308
        %v573 = vunpack.c.l.b16 %v309
        %v574 = vunpack.c.l.b16 %v310
        %v575 = vunpack.c.l.b16 %v311
        %v576 = vunpack.c.l.b16 %v312
        %v577 = vunpack.c.l.b16 %v313
        %v578 = vunpack.c.l.b16 %v314
        %v579 = vunpack.c.l.b16 %v315
        %v580 = vunpack.c.l.b16 %v316
        %v581 = vunpack.c.l.b16 %v317
        %v582 = vunpack.c.l.b16 %v318
        %v583 = vunpack.c.l.b16 %v319
        %v584 = vunpack.c.l.b16 %v320
        %v585 = vunpack.c.l.b16 %v321
        %v586 = vunpack.c.l.b16 %v322
        %v587 = vunpack.c.l.b16 %v323
        %v588 = vunpack.c.l.b16 %v324
        %v589 = vunpack.c.l.b16 %v325
        %v590 = vunpack.c.l.b16 %v326
        %v591 = vunpack.c.l.b16 %v327
        %v592 = vunpack.c.l.b16 %v328
        %v593 = vunpack.c.l.b16 %v329
        %v594 = vunpack.c.l.b16 %v330
        %v595 = vunpack.c.l.b16 %v331
        %v596 = vunpack.c.l.b16 %v332
        %v597 = vunpack.c.l.b16 %v333
        %v598 = vunpack.c.l.b16 %v334
        %v599 = vunpack.c.l.b16 %v335
        %v600 = vunpack.c.l.b16 %v336
        %v601 = vunpack.c.l.b16 %v337
        %v602 = vunpack.c.l.b16 %v338
        %v603 = vunpack.c.l.b16 %v339
        %v604 = vunpack.c.l.b16 %v340
        %v605 = vunpack.c.l.b16 %v341
        %v606 = vunpack.c.l.b16 %v342
        %v607 = vunpack.c.l.b16 %v343
        %v608 = vunpack.c.l.b16 %v344
        %v609 = vunpack.c.l.b16 %v345
        %v610 = vunpack.c.l.b16 %v346
        %v611 = vunpack.c.l.b16 %v347
        %v612 = vunpack.c.l.b16 %v348
        %v613 = vunpack.c.l.b16 %v349
        %v614 = vunpack.c.l.b16 %v350
        %v615 = vunpack.c.l.b16 %v351
        %v616 = vunpack.c.l.b16 %v352
        %v617 = vunpack.c.l.b16 %v353
        %v618 = vunpack.c.l.b16 %v354
        %v619 = vunpack.c.l.b16 %v355
        %v620 = vunpack.c.l.b16 %v356
        %v621 = vunpack.c.l.b16 %v357
        %v622 = vunpack.c.l.b16 %v358
        %v623 = vunpack.c.l.b16 %v359
        %v624 = vunpack.c.l.b16 %v360
        %v625 = vunpack.c.l.b16 %v361
        %v626 = vunpack.c.l.b16 %v362
        %v627 = vunpack.c.l.b16 %v363
        %v628 = vunpack.c.l.b16 %v364
        %v629 = vunpack.c.l.b16 %v365
        %v630 = vunpack.c.l.b16 %v366
        %v631 = vunpack.c.l.b16 %v367
        %v632 = vunpack.c.l.b16 %v368
        %v633 = vunpack.c.l.b16 %v369
        %v634 = vunpack.c.l.b16 %v370
        %v635 = vpack.c.b16 %v508, %v507
        %v636 = vpack.c.b16 %v510, %v509
        %v637 = vpack.c.b16 %v512, %v511
        %v638 = vpack.c.b16 %v514, %v513
        %v639 = vpack.c.b16 %v516, %v515
        %v640 = vpack.c.b16 %v518, %v517
        %v641 = vpack.c.b16 %v520, %v519
        %v642 = vpack.c.b16 %v522, %v521
        %v643 = vpack.c.b16 %v524, %v523
        %v644 = vpack.c.b16 %v526, %v525
        %v645 = vpack.c.b16 %v528, %v527
        %v646 = vpack.c.b16 %v530, %v529
        %v647 = vpack.c.b16 %v532, %v531
        %v648 = vpack.c.b16 %v534, %v533
        %v649 = vpack.c.b16 %v536, %v535
        %v650 = vpack.c.b16 %v538, %v537
        %v651 = vpack.c.b16 %v540, %v539
        %v652 = vpack.c.b16 %v542, %v541
        %v653 = vpack.c.b16 %v544, %v543
        %v654 = vpack.c.b16 %v546, %v545
        %v655 = vpack.c.b16 %v548, %v547
        %v656 = vpack.c.b16 %v550, %v549
        %v657 = vpack.c.b16 %v552, %v551
        %v658 = vpack.c.b16 %v554, %v553
        %v659 = vpack.c.b16 %v556, %v555
        %v660 = vpack.c.b16 %v558, %v557
        %v661 = vpack.c.b16 %v560, %v559
        %v662 = vpack.c.b16 %v562, %v561
        %v663 = vpack.c.b16 %v564, %v563
        %v664 = vpack.c.b16 %v566, %v565
        %v665 = vpack.c.b16 %v568, %v567
        %v666 = vpack.c.b16 %v570, %v569
        %v667 = vpack.c.b16 %v572, %v571
        %v668 = vpack.c.b16 %v574, %v573
        %v669 = vpack.c.b16 %v576, %v575
        %v670 = vpack.c.b16 %v578, %v577
        %v671 = vpack.c.b16 %v580, %v579
        %v672 = vpack.c.b16 %v582, %v581
        %v673 = vpack.c.b16 %v584, %v583
        %v674 = vpack.c.b16 %v586, %v585
        %v675 = vpack.c.b16 %v588, %v587
        %v676 = vpack.c.b16 %v590, %v589
        %v677 = vpack.c.b16 %v592, %v591
        %v678 = vpack.c.b16 %v594, %v593
        %v679 = vpack.c.b16 %v596, %v595
        %v680 = vpack.c.b16 %v598, %v597
        %v681 = vpack.c.b16 %v600, %v599
        %v682 = vpack.c.b16 %v602, %v601
        %v683 = vpack.c.b16 %v604, %v603
        %v684 = vpack.c.b16 %v606, %v605
        %v685 = vpack.c.b16 %v608, %v607
        %v686 = vpack.c.b16 %v610, %v609
        %v687 = vpack.c.b16 %v612, %v611
        %v688 = vpack.c.b16 %v614, %v613
        %v689 = vpack.c.b16 %v616, %v615
        %v690 = vpack.c.b16 %v618, %v617
        %v691 = vpack.c.b16 %v620, %v619
        %v692 = vpack.c.b16 %v622, %v621
        %v693 = vpack.c.b16 %v624, %v623
        %v694 = vpack.c.b16 %v626, %v625
        %v695 = vpack.c.b16 %v628, %v627
        %v696 = vpack.c.b16 %v630, %v629
        %v697 = vpack.c.b16 %v632, %v631
        %v698 = vpack.c.b16 %v634, %v633
        %v703 = vunpack.c.l.b16 %v371
        %v704 = vunpack.c.l.b16 %v372
        %v705 = vunpack.c.l.b16 %v373
        %v706 = vunpack.c.l.b16 %v374
        %v707 = vpack.c.b16 %v704, %v703
        %v708 = vpack.c.b16 %v706, %v705
        %vm710 = vcmask 220160
        %v712 = vsel %vm710, %v635, 0
        %v715 = vsel %vm710, %v636, 0
        %v718 = vsel %vm710, %v637, 0
        %v721 = vsel %vm710, %v638, 0
        %v724 = vsel %vm710, %v639, 0
        %v727 = vsel %vm710, %v640, 0
        %v730 = vsel %vm710, %v641, 0
        %v733 = vsel %vm710, %v642, 0
        %v736 = vsel %vm710, %v643, 0
        %v739 = vsel %vm710, %v644, 0
        %v742 = vsel %vm710, %v645, 0
        %v745 = vsel %vm710, %v646, 0
        %v748 = vsel %vm710, %v647, 0
        %v751 = vsel %vm710, %v648, 0
        %v754 = vsel %vm710, %v649, 0
        %v757 = vsel %vm710, %v650, 0
        %v760 = vsel %vm710, %v651, 0
        %v763 = vsel %vm710, %v652, 0
        %v766 = vsel %vm710, %v653, 0
        %v769 = vsel %vm710, %v654, 0
        %v772 = vsel %vm710, %v655, 0
        %v775 = vsel %vm710, %v656, 0
        %v778 = vsel %vm710, %v657, 0
        %v781 = vsel %vm710, %v658, 0
        %v784 = vsel %vm710, %v659, 0
        %v787 = vsel %vm710, %v660, 0
        %v790 = vsel %vm710, %v661, 0
        %v793 = vsel %vm710, %v662, 0
        %v796 = vsel %vm710, %v663, 0
        %v799 = vsel %vm710, %v664, 0
        %v802 = vsel %vm710, %v665, 0
        %v805 = vsel %vm710, %v666, 0
        %v808 = vsel %vm710, %v667, 0
        %v811 = vsel %vm710, %v668, 0
        %v814 = vsel %vm710, %v669, 0
        %v817 = vsel %vm710, %v670, 0
        %v820 = vsel %vm710, %v671, 0
        %v823 = vsel %vm710, %v672, 0
        %v826 = vsel %vm710, %v673, 0
        %v829 = vsel %vm710, %v674, 0
        %v832 = vsel %vm710, %v675, 0
        %v835 = vsel %vm710, %v676, 0
        %v838 = vsel %vm710, %v677, 0
        %v841 = vsel %vm710, %v678, 0
        %v844 = vsel %vm710, %v679, 0
        %v847 = vsel %vm710, %v680, 0
        %v850 = vsel %vm710, %v681, 0
        %v853 = vsel %vm710, %v682, 0
        %v856 = vsel %vm710, %v683, 0
        %v859 = vsel %vm710, %v684, 0
        %v862 = vsel %vm710, %v685, 0
        %v865 = vsel %vm710, %v686, 0
        %v868 = vsel %vm710, %v687, 0
        %v871 = vsel %vm710, %v688, 0
        %v874 = vsel %vm710, %v689, 0
        %v877 = vsel %vm710, %v690, 0
        %v880 = vsel %vm710, %v691, 0
        %v883 = vsel %vm710, %v692, 0
        %v886 = vsel %vm710, %v693, 0
        %v889 = vsel %vm710, %v694, 0
        %v892 = vsel %vm710, %v695, 0
        %v895 = vsel %vm710, %v696, 0
        %v898 = vsel %vm710, %v697, 0
        %v901 = vsel %vm710, %v698, 0
        %vm903 = vcmask 1044480
        %vm904 = vcmask 1045504
        %v905 = vsel %vm903, 4294967295, 65535
        %v906 = vsel %vm904, %v905, 0
        %v908 = vand.u32 %v708, %v906
        %910 = vmatpush.bf16.msra.mxu0 0
        %911 = vmatpush.bf16.msra.mxu0 0
        %912 = vmatpush.bf16.msra.mxu0 0
        %913 = vmatpush.bf16.msra.mxu0 0
        %914 = vmatpush.bf16.msra.mxu0 0
        %915 = vmatpush.bf16.msra.mxu0 0
        %916 = vmatpush.bf16.msra.mxu0 %v908
        %917 = vmatpush.bf16.msra.mxu0 %v707
        %918 = vmatmul.bf16.gmra.mxu0 %v712
        %v919 = vpop.f32.mrf.mxu0
        %v920 = vadd.f32 %v377, %v919
        %v921 = vpop.f32.mrf.mxu0
        %v922 = vadd.f32 %v377, %v921
        %923 = vmatmul.bf16.gmra.mxu0 %v715
        %v924 = vpop.f32.mrf.mxu0
        %v925 = vadd.f32 %v377, %v924
        %v926 = vpop.f32.mrf.mxu0
        %v927 = vadd.f32 %v377, %v926
        %928 = vmatmul.bf16.gmra.mxu0 %v718
        %v929 = vpop.f32.mrf.mxu0
        %v930 = vadd.f32 %v377, %v929
        %v931 = vpop.f32.mrf.mxu0
        %v932 = vadd.f32 %v377, %v931
        %933 = vmatmul.bf16.gmra.mxu0 %v721
        %v934 = vpop.f32.mrf.mxu0
        %v935 = vadd.f32 %v377, %v934
        %v936 = vpop.f32.mrf.mxu0
        %v937 = vadd.f32 %v377, %v936
        %938 = vmatmul.bf16.gmra.mxu0 %v724
        %v939 = vpop.f32.mrf.mxu0
        %v940 = vadd.f32 %v377, %v939
        %v941 = vpop.f32.mrf.mxu0
        %v942 = vadd.f32 %v377, %v941
        %943 = vmatmul.bf16.gmra.mxu0 %v727
        %v944 = vpop.f32.mrf.mxu0
        %v945 = vadd.f32 %v377, %v944
        %v946 = vpop.f32.mrf.mxu0
        %v947 = vadd.f32 %v377, %v946
        %948 = vmatmul.bf16.gmra.mxu0 %v730
        %v949 = vpop.f32.mrf.mxu0
        %v950 = vadd.f32 %v377, %v949
        %v951 = vpop.f32.mrf.mxu0
        %v952 = vadd.f32 %v377, %v951
        %953 = vmatmul.bf16.gmra.mxu0 %v733
        %v954 = vpop.f32.mrf.mxu0
        %v955 = vadd.f32 %v377, %v954
        %v956 = vpop.f32.mrf.mxu0
        %v957 = vadd.f32 %v377, %v956
        %958 = vmatmul.bf16.gmra.mxu0 %v736
        %v959 = vpop.f32.mrf.mxu0
        %v960 = vadd.f32 %v377, %v959
        %v961 = vpop.f32.mrf.mxu0
        %v962 = vadd.f32 %v377, %v961
        %963 = vmatmul.bf16.gmra.mxu0 %v739
        %v964 = vpop.f32.mrf.mxu0
        %v965 = vadd.f32 %v377, %v964
        %v966 = vpop.f32.mrf.mxu0
        %v967 = vadd.f32 %v377, %v966
        %968 = vmatmul.bf16.gmra.mxu0 %v742
        %v969 = vpop.f32.mrf.mxu0
        %v970 = vadd.f32 %v377, %v969
        %v971 = vpop.f32.mrf.mxu0
        %v972 = vadd.f32 %v377, %v971
        %973 = vmatmul.bf16.gmra.mxu0 %v745
        %v974 = vpop.f32.mrf.mxu0
        %v975 = vadd.f32 %v377, %v974
        %v976 = vpop.f32.mrf.mxu0
        %v977 = vadd.f32 %v377, %v976
        %978 = vmatmul.bf16.gmra.mxu0 %v748
        %v979 = vpop.f32.mrf.mxu0
        %v980 = vadd.f32 %v377, %v979
        %v981 = vpop.f32.mrf.mxu0
        %v982 = vadd.f32 %v377, %v981
        %983 = vmatmul.bf16.gmra.mxu0 %v751
        %v984 = vpop.f32.mrf.mxu0
        %v985 = vadd.f32 %v377, %v984
        %v986 = vpop.f32.mrf.mxu0
        %v987 = vadd.f32 %v377, %v986
        %988 = vmatmul.bf16.gmra.mxu0 %v754
        %v989 = vpop.f32.mrf.mxu0
        %v990 = vadd.f32 %v377, %v989
        %v991 = vpop.f32.mrf.mxu0
        %v992 = vadd.f32 %v377, %v991
        %993 = vmatmul.bf16.gmra.mxu0 %v757
        %v994 = vpop.f32.mrf.mxu0
        %v995 = vadd.f32 %v377, %v994
        %v996 = vpop.f32.mrf.mxu0
        %v997 = vadd.f32 %v377, %v996
        %998 = vmatmul.bf16.gmra.mxu0 %v760
        %v999 = vpop.f32.mrf.mxu0
        %v1000 = vadd.f32 %v377, %v999
        %v1001 = vpop.f32.mrf.mxu0
        %v1002 = vadd.f32 %v377, %v1001
        %1003 = vmatmul.bf16.gmra.mxu0 %v763
        %v1004 = vpop.f32.mrf.mxu0
        %v1005 = vadd.f32 %v377, %v1004
        %v1006 = vpop.f32.mrf.mxu0
        %v1007 = vadd.f32 %v377, %v1006
        %1008 = vmatmul.bf16.gmra.mxu0 %v766
        %v1009 = vpop.f32.mrf.mxu0
        %v1010 = vadd.f32 %v377, %v1009
        %v1011 = vpop.f32.mrf.mxu0
        %v1012 = vadd.f32 %v377, %v1011
        %1013 = vmatmul.bf16.gmra.mxu0 %v769
        %v1014 = vpop.f32.mrf.mxu0
        %v1015 = vadd.f32 %v377, %v1014
        %v1016 = vpop.f32.mrf.mxu0
        %v1017 = vadd.f32 %v377, %v1016
        %1018 = vmatmul.bf16.gmra.mxu0 %v772
        %v1019 = vpop.f32.mrf.mxu0
        %v1020 = vadd.f32 %v377, %v1019
        %v1021 = vpop.f32.mrf.mxu0
        %v1022 = vadd.f32 %v377, %v1021
        %1023 = vmatmul.bf16.gmra.mxu0 %v775
        %v1024 = vpop.f32.mrf.mxu0
        %v1025 = vadd.f32 %v377, %v1024
        %v1026 = vpop.f32.mrf.mxu0
        %v1027 = vadd.f32 %v377, %v1026
        %1028 = vmatmul.bf16.gmra.mxu0 %v778
        %v1029 = vpop.f32.mrf.mxu0
        %v1030 = vadd.f32 %v377, %v1029
        %v1031 = vpop.f32.mrf.mxu0
        %v1032 = vadd.f32 %v377, %v1031
        %1033 = vmatmul.bf16.gmra.mxu0 %v781
        %v1034 = vpop.f32.mrf.mxu0
        %v1035 = vadd.f32 %v377, %v1034
        %v1036 = vpop.f32.mrf.mxu0
        %v1037 = vadd.f32 %v377, %v1036
        %1038 = vmatmul.bf16.gmra.mxu0 %v784
        %v1039 = vpop.f32.mrf.mxu0
        %v1040 = vadd.f32 %v377, %v1039
        %v1041 = vpop.f32.mrf.mxu0
        %v1042 = vadd.f32 %v377, %v1041
        %1043 = vmatmul.bf16.gmra.mxu0 %v787
        %v1044 = vpop.f32.mrf.mxu0
        %v1045 = vadd.f32 %v377, %v1044
        %v1046 = vpop.f32.mrf.mxu0
        %v1047 = vadd.f32 %v377, %v1046
        %1048 = vmatmul.bf16.gmra.mxu0 %v790
        %v1049 = vpop.f32.mrf.mxu0
        %v1050 = vadd.f32 %v377, %v1049
        %v1051 = vpop.f32.mrf.mxu0
        %v1052 = vadd.f32 %v377, %v1051
        %1053 = vmatmul.bf16.gmra.mxu0 %v793
        %v1054 = vpop.f32.mrf.mxu0
        %v1055 = vadd.f32 %v377, %v1054
        %v1056 = vpop.f32.mrf.mxu0
        %v1057 = vadd.f32 %v377, %v1056
        %1058 = vmatmul.bf16.gmra.mxu0 %v796
        %v1059 = vpop.f32.mrf.mxu0
        %v1060 = vadd.f32 %v377, %v1059
        %v1061 = vpop.f32.mrf.mxu0
        %v1062 = vadd.f32 %v377, %v1061
        %1063 = vmatmul.bf16.gmra.mxu0 %v799
        %v1064 = vpop.f32.mrf.mxu0
        %v1065 = vadd.f32 %v377, %v1064
        %v1066 = vpop.f32.mrf.mxu0
        %v1067 = vadd.f32 %v377, %v1066
        %1068 = vmatmul.bf16.gmra.mxu0 %v802
        %v1069 = vpop.f32.mrf.mxu0
        %v1070 = vadd.f32 %v377, %v1069
        %v1071 = vpop.f32.mrf.mxu0
        %v1072 = vadd.f32 %v377, %v1071
        %1073 = vmatmul.bf16.gmra.mxu0 %v805
        %v1074 = vpop.f32.mrf.mxu0
        %v1075 = vadd.f32 %v377, %v1074
        %v1076 = vpop.f32.mrf.mxu0
        %v1077 = vadd.f32 %v377, %v1076
        %1078 = vmatmul.bf16.gmra.mxu0 %v808
        %v1079 = vpop.f32.mrf.mxu0
        %v1080 = vadd.f32 %v377, %v1079
        %v1081 = vpop.f32.mrf.mxu0
        %v1082 = vadd.f32 %v377, %v1081
        %1083 = vmatmul.bf16.gmra.mxu0 %v811
        %v1084 = vpop.f32.mrf.mxu0
        %v1085 = vadd.f32 %v377, %v1084
        %v1086 = vpop.f32.mrf.mxu0
        %v1087 = vadd.f32 %v377, %v1086
        %1088 = vmatmul.bf16.gmra.mxu0 %v814
        %v1089 = vpop.f32.mrf.mxu0
        %v1090 = vadd.f32 %v377, %v1089
        %v1091 = vpop.f32.mrf.mxu0
        %v1092 = vadd.f32 %v377, %v1091
        %1093 = vmatmul.bf16.gmra.mxu0 %v817
        %v1094 = vpop.f32.mrf.mxu0
        %v1095 = vadd.f32 %v377, %v1094
        %v1096 = vpop.f32.mrf.mxu0
        %v1097 = vadd.f32 %v377, %v1096
        %1098 = vmatmul.bf16.gmra.mxu0 %v820
        %v1099 = vpop.f32.mrf.mxu0
        %v1100 = vadd.f32 %v377, %v1099
        %v1101 = vpop.f32.mrf.mxu0
        %v1102 = vadd.f32 %v377, %v1101
        %1103 = vmatmul.bf16.gmra.mxu0 %v823
        %v1104 = vpop.f32.mrf.mxu0
        %v1105 = vadd.f32 %v377, %v1104
        %v1106 = vpop.f32.mrf.mxu0
        %v1107 = vadd.f32 %v377, %v1106
        %1108 = vmatmul.bf16.gmra.mxu0 %v826
        %v1109 = vpop.f32.mrf.mxu0
        %v1110 = vadd.f32 %v377, %v1109
        %v1111 = vpop.f32.mrf.mxu0
        %v1112 = vadd.f32 %v377, %v1111
        %1113 = vmatmul.bf16.gmra.mxu0 %v829
        %v1114 = vpop.f32.mrf.mxu0
        %v1115 = vadd.f32 %v377, %v1114
        %v1116 = vpop.f32.mrf.mxu0
        %v1117 = vadd.f32 %v377, %v1116
        %1118 = vmatmul.bf16.gmra.mxu0 %v832
        %v1119 = vpop.f32.mrf.mxu0
        %v1120 = vadd.f32 %v377, %v1119
        %v1121 = vpop.f32.mrf.mxu0
        %v1122 = vadd.f32 %v377, %v1121
        %1123 = vmatmul.bf16.gmra.mxu0 %v835
        %v1124 = vpop.f32.mrf.mxu0
        %v1125 = vadd.f32 %v377, %v1124
        %v1126 = vpop.f32.mrf.mxu0
        %v1127 = vadd.f32 %v377, %v1126
        %1128 = vmatmul.bf16.gmra.mxu0 %v838
        %v1129 = vpop.f32.mrf.mxu0
        %v1130 = vadd.f32 %v377, %v1129
        %v1131 = vpop.f32.mrf.mxu0
        %v1132 = vadd.f32 %v377, %v1131
        %1133 = vmatmul.bf16.gmra.mxu0 %v841
        %v1134 = vpop.f32.mrf.mxu0
        %v1135 = vadd.f32 %v377, %v1134
        %v1136 = vpop.f32.mrf.mxu0
        %v1137 = vadd.f32 %v377, %v1136
        %1138 = vmatmul.bf16.gmra.mxu0 %v844
        %v1139 = vpop.f32.mrf.mxu0
        %v1140 = vadd.f32 %v377, %v1139
        %v1141 = vpop.f32.mrf.mxu0
        %v1142 = vadd.f32 %v377, %v1141
        %1143 = vmatmul.bf16.gmra.mxu0 %v847
        %v1144 = vpop.f32.mrf.mxu0
        %v1145 = vadd.f32 %v377, %v1144
        %v1146 = vpop.f32.mrf.mxu0
        %v1147 = vadd.f32 %v377, %v1146
        %1148 = vmatmul.bf16.gmra.mxu0 %v850
        %v1149 = vpop.f32.mrf.mxu0
        %v1150 = vadd.f32 %v377, %v1149
        %v1151 = vpop.f32.mrf.mxu0
        %v1152 = vadd.f32 %v377, %v1151
        %1153 = vmatmul.bf16.gmra.mxu0 %v853
        %v1154 = vpop.f32.mrf.mxu0
        %v1155 = vadd.f32 %v377, %v1154
        %v1156 = vpop.f32.mrf.mxu0
        %v1157 = vadd.f32 %v377, %v1156
        %1158 = vmatmul.bf16.gmra.mxu0 %v856
        %v1159 = vpop.f32.mrf.mxu0
        %v1160 = vadd.f32 %v377, %v1159
        %v1161 = vpop.f32.mrf.mxu0
        %v1162 = vadd.f32 %v377, %v1161
        %1163 = vmatmul.bf16.gmra.mxu0 %v859
        %v1164 = vpop.f32.mrf.mxu0
        %v1165 = vadd.f32 %v377, %v1164
        %v1166 = vpop.f32.mrf.mxu0
        %v1167 = vadd.f32 %v377, %v1166
        %1168 = vmatmul.bf16.gmra.mxu0 %v862
        %v1169 = vpop.f32.mrf.mxu0
        %v1170 = vadd.f32 %v377, %v1169
        %v1171 = vpop.f32.mrf.mxu0
        %v1172 = vadd.f32 %v377, %v1171
        %1173 = vmatmul.bf16.gmra.mxu0 %v865
        %v1174 = vpop.f32.mrf.mxu0
        %v1175 = vadd.f32 %v377, %v1174
        %v1176 = vpop.f32.mrf.mxu0
        %v1177 = vadd.f32 %v377, %v1176
        %1178 = vmatmul.bf16.gmra.mxu0 %v868
        %v1179 = vpop.f32.mrf.mxu0
        %v1180 = vadd.f32 %v377, %v1179
        %v1181 = vpop.f32.mrf.mxu0
        %v1182 = vadd.f32 %v377, %v1181
        %1183 = vmatmul.bf16.gmra.mxu0 %v871
        %v1184 = vpop.f32.mrf.mxu0
        %v1185 = vadd.f32 %v377, %v1184
        %v1186 = vpop.f32.mrf.mxu0
        %v1187 = vadd.f32 %v377, %v1186
        %1188 = vmatmul.bf16.gmra.mxu0 %v874
        %v1189 = vpop.f32.mrf.mxu0
        %v1190 = vadd.f32 %v377, %v1189
        %v1191 = vpop.f32.mrf.mxu0
        %v1192 = vadd.f32 %v377, %v1191
        %1193 = vmatmul.bf16.gmra.mxu0 %v877
        %v1194 = vpop.f32.mrf.mxu0
        %v1195 = vadd.f32 %v377, %v1194
        %v1196 = vpop.f32.mrf.mxu0
        %v1197 = vadd.f32 %v377, %v1196
        %1198 = vmatmul.bf16.gmra.mxu0 %v880
        %v1199 = vpop.f32.mrf.mxu0
        %v1200 = vadd.f32 %v377, %v1199
        %v1201 = vpop.f32.mrf.mxu0
        %v1202 = vadd.f32 %v377, %v1201
        %1203 = vmatmul.bf16.gmra.mxu0 %v883
        %v1204 = vpop.f32.mrf.mxu0
        %v1205 = vadd.f32 %v377, %v1204
        %v1206 = vpop.f32.mrf.mxu0
        %v1207 = vadd.f32 %v377, %v1206
        %1208 = vmatmul.bf16.gmra.mxu0 %v886
        %v1209 = vpop.f32.mrf.mxu0
        %v1210 = vadd.f32 %v377, %v1209
        %v1211 = vpop.f32.mrf.mxu0
        %v1212 = vadd.f32 %v377, %v1211
        %1213 = vmatmul.bf16.gmra.mxu0 %v889
        %v1214 = vpop.f32.mrf.mxu0
        %v1215 = vadd.f32 %v377, %v1214
        %v1216 = vpop.f32.mrf.mxu0
        %v1217 = vadd.f32 %v377, %v1216
        %1218 = vmatmul.bf16.gmra.mxu0 %v892
        %v1219 = vpop.f32.mrf.mxu0
        %v1220 = vadd.f32 %v377, %v1219
        %v1221 = vpop.f32.mrf.mxu0
        %v1222 = vadd.f32 %v377, %v1221
        %1223 = vmatmul.bf16.gmra.mxu0 %v895
        %v1224 = vpop.f32.mrf.mxu0
        %v1225 = vadd.f32 %v377, %v1224
        %v1226 = vpop.f32.mrf.mxu0
        %v1227 = vadd.f32 %v377, %v1226
        %1228 = vmatmul.bf16.gmra.mxu0 %v898
        %v1229 = vpop.f32.mrf.mxu0
        %v1230 = vadd.f32 %v377, %v1229
        %v1231 = vpop.f32.mrf.mxu0
        %v1232 = vadd.f32 %v377, %v1231
        %1233 = vmatmul.bf16.gmra.mxu0 %v901
        %v1234 = vpop.f32.mrf.mxu0
        %v1235 = vadd.f32 %v377, %v1234
        %v1236 = vpop.f32.mrf.mxu0
        %v1237 = vadd.f32 %v377, %v1236
        %1238 = vdwg.mxu0
        %v1239 = vmax.f32 %v920, 0.0
        %v1240 = vmax.f32 %v922, 0.0
        %v1241 = vmax.f32 %v925, 0.0
        %v1242 = vmax.f32 %v927, 0.0
        %v1243 = vmax.f32 %v930, 0.0
        %v1244 = vmax.f32 %v932, 0.0
        %v1245 = vmax.f32 %v935, 0.0
        %v1246 = vmax.f32 %v937, 0.0
        %v1247 = vmax.f32 %v940, 0.0
        %v1248 = vmax.f32 %v942, 0.0
        %v1249 = vmax.f32 %v945, 0.0
        %v1250 = vmax.f32 %v947, 0.0
        %v1251 = vmax.f32 %v950, 0.0
        %v1252 = vmax.f32 %v952, 0.0
        %v1253 = vmax.f32 %v955, 0.0
        %v1254 = vmax.f32 %v957, 0.0
        %v1255 = vmax.f32 %v960, 0.0
        %v1256 = vmax.f32 %v962, 0.0
        %v1257 = vmax.f32 %v965, 0.0
        %v1258 = vmax.f32 %v967, 0.0
        %v1259 = vmax.f32 %v970, 0.0
        %v1260 = vmax.f32 %v972, 0.0
        %v1261 = vmax.f32 %v975, 0.0
        %v1262 = vmax.f32 %v977, 0.0
        %v1263 = vmax.f32 %v980, 0.0
        %v1264 = vmax.f32 %v982, 0.0
        %v1265 = vmax.f32 %v985, 0.0
        %v1266 = vmax.f32 %v987, 0.0
        %v1267 = vmax.f32 %v990, 0.0
        %v1268 = vmax.f32 %v992, 0.0
        %v1269 = vmax.f32 %v995, 0.0
        %v1270 = vmax.f32 %v997, 0.0
        %v1271 = vmax.f32 %v1000, 0.0
        %v1272 = vmax.f32 %v1002, 0.0
        %v1273 = vmax.f32 %v1005, 0.0
        %v1274 = vmax.f32 %v1007, 0.0
        %v1275 = vmax.f32 %v1010, 0.0
        %v1276 = vmax.f32 %v1012, 0.0
        %v1277 = vmax.f32 %v1015, 0.0
        %v1278 = vmax.f32 %v1017, 0.0
        %v1279 = vmax.f32 %v1020, 0.0
        %v1280 = vmax.f32 %v1022, 0.0
        %v1281 = vmax.f32 %v1025, 0.0
        %v1282 = vmax.f32 %v1027, 0.0
        %v1283 = vmax.f32 %v1030, 0.0
        %v1284 = vmax.f32 %v1032, 0.0
        %v1285 = vmax.f32 %v1035, 0.0
        %v1286 = vmax.f32 %v1037, 0.0
        %v1287 = vmax.f32 %v1040, 0.0
        %v1288 = vmax.f32 %v1042, 0.0
        %v1289 = vmax.f32 %v1045, 0.0
        %v1290 = vmax.f32 %v1047, 0.0
        %v1291 = vmax.f32 %v1050, 0.0
        %v1292 = vmax.f32 %v1052, 0.0
        %v1293 = vmax.f32 %v1055, 0.0
        %v1294 = vmax.f32 %v1057, 0.0
        %v1295 = vmax.f32 %v1060, 0.0
        %v1296 = vmax.f32 %v1062, 0.0
        %v1297 = vmax.f32 %v1065, 0.0
        %v1298 = vmax.f32 %v1067, 0.0
        %v1299 = vmax.f32 %v1070, 0.0
        %v1300 = vmax.f32 %v1072, 0.0
        %v1301 = vmax.f32 %v1075, 0.0
        %v1302 = vmax.f32 %v1077, 0.0
        %v1303 = vmax.f32 %v1080, 0.0
        %v1304 = vmax.f32 %v1082, 0.0
        %v1305 = vmax.f32 %v1085, 0.0
        %v1306 = vmax.f32 %v1087, 0.0
        %v1307 = vmax.f32 %v1090, 0.0
        %v1308 = vmax.f32 %v1092, 0.0
        %v1309 = vmax.f32 %v1095, 0.0
        %v1310 = vmax.f32 %v1097, 0.0
        %v1311 = vmax.f32 %v1100, 0.0
        %v1312 = vmax.f32 %v1102, 0.0
        %v1313 = vmax.f32 %v1105, 0.0
        %v1314 = vmax.f32 %v1107, 0.0
        %v1315 = vmax.f32 %v1110, 0.0
        %v1316 = vmax.f32 %v1112, 0.0
        %v1317 = vmax.f32 %v1115, 0.0
        %v1318 = vmax.f32 %v1117, 0.0
        %v1319 = vmax.f32 %v1120, 0.0
        %v1320 = vmax.f32 %v1122, 0.0
        %v1321 = vmax.f32 %v1125, 0.0
        %v1322 = vmax.f32 %v1127, 0.0
        %v1323 = vmax.f32 %v1130, 0.0
        %v1324 = vmax.f32 %v1132, 0.0
        %v1325 = vmax.f32 %v1135, 0.0
        %v1326 = vmax.f32 %v1137, 0.0
        %v1327 = vmax.f32 %v1140, 0.0
        %v1328 = vmax.f32 %v1142, 0.0
        %v1329 = vmax.f32 %v1145, 0.0
        %v1330 = vmax.f32 %v1147, 0.0
        %v1331 = vmax.f32 %v1150, 0.0
        %v1332 = vmax.f32 %v1152, 0.0
        %v1333 = vmax.f32 %v1155, 0.0
        %v1334 = vmax.f32 %v1157, 0.0
        %v1335 = vmax.f32 %v1160, 0.0
        %v1336 = vmax.f32 %v1162, 0.0
        %v1337 = vmax.f32 %v1165, 0.0
        %v1338 = vmax.f32 %v1167, 0.0
        %v1339 = vmax.f32 %v1170, 0.0
        %v1340 = vmax.f32 %v1172, 0.0
        %v1341 = vmax.f32 %v1175, 0.0
        %v1342 = vmax.f32 %v1177, 0.0
        %v1343 = vmax.f32 %v1180, 0.0
        %v1344 = vmax.f32 %v1182, 0.0
        %v1345 = vmax.f32 %v1185, 0.0
        %v1346 = vmax.f32 %v1187, 0.0
        %v1347 = vmax.f32 %v1190, 0.0
        %v1348 = vmax.f32 %v1192, 0.0
        %v1349 = vmax.f32 %v1195, 0.0
        %v1350 = vmax.f32 %v1197, 0.0
        %v1351 = vmax.f32 %v1200, 0.0
        %v1352 = vmax.f32 %v1202, 0.0
        %v1353 = vmax.f32 %v1205, 0.0
        %v1354 = vmax.f32 %v1207, 0.0
        %v1355 = vmax.f32 %v1210, 0.0
        %v1356 = vmax.f32 %v1212, 0.0
        %v1357 = vmax.f32 %v1215, 0.0
        %v1358 = vmax.f32 %v1217, 0.0
        %v1359 = vmax.f32 %v1220, 0.0
        %v1360 = vmax.f32 %v1222, 0.0
        %v1361 = vmax.f32 %v1225, 0.0
        %v1362 = vmax.f32 %v1227, 0.0
        %v1363 = vmax.f32 %v1230, 0.0
        %v1364 = vmax.f32 %v1232, 0.0
        %v1365 = vmax.f32 %v1235, 0.0
        %v1366 = vmax.f32 %v1237, 0.0
        %vm1367 = vcmask 261120
        %1368 = vst.msk [vmem:[%s240] sm:$0xff] %vm1367, %v1239
        %1369 = vst.msk [vmem:[%s240 + $0x8] sm:$0xff] %vm1367, %v1240
        %1370 = vst.msk [vmem:[%s240 + $0x10] sm:$0xff] %vm1367, %v1241
        %1371 = vst.msk [vmem:[%s240 + $0x18] sm:$0xff] %vm1367, %v1242
        %1372 = vst.msk [vmem:[%s240 + $0x20] sm:$0xff] %vm1367, %v1243
        %1373 = vst.msk [vmem:[%s240 + $0x28] sm:$0xff] %vm1367, %v1244
        %1374 = vst.msk [vmem:[%s240 + $0x30] sm:$0xff] %vm1367, %v1245
        %1375 = vst.msk [vmem:[%s240 + $0x38] sm:$0xff] %vm1367, %v1246
        %1376 = vst.msk [vmem:[%s240 + $0x40] sm:$0xff] %vm1367, %v1247
        %1377 = vst.msk [vmem:[%s240 + $0x48] sm:$0xff] %vm1367, %v1248
        %1378 = vst.msk [vmem:[%s240 + $0x50] sm:$0xff] %vm1367, %v1249
        %1379 = vst.msk [vmem:[%s240 + $0x58] sm:$0xff] %vm1367, %v1250
        %1380 = vst.msk [vmem:[%s240 + $0x60] sm:$0xff] %vm1367, %v1251
        %1381 = vst.msk [vmem:[%s240 + $0x68] sm:$0xff] %vm1367, %v1252
        %1382 = vst.msk [vmem:[%s240 + $0x70] sm:$0xff] %vm1367, %v1253
        %1383 = vst.msk [vmem:[%s240 + $0x78] sm:$0xff] %vm1367, %v1254
        %1384 = vst.msk [vmem:[%s240 + $0x80] sm:$0xff] %vm1367, %v1255
        %1385 = vst.msk [vmem:[%s240 + $0x88] sm:$0xff] %vm1367, %v1256
        %1386 = vst.msk [vmem:[%s240 + $0x90] sm:$0xff] %vm1367, %v1257
        %1387 = vst.msk [vmem:[%s240 + $0x98] sm:$0xff] %vm1367, %v1258
        %1388 = vst.msk [vmem:[%s240 + $0xa0] sm:$0xff] %vm1367, %v1259
        %1389 = vst.msk [vmem:[%s240 + $0xa8] sm:$0xff] %vm1367, %v1260
        %1390 = vst.msk [vmem:[%s240 + $0xb0] sm:$0xff] %vm1367, %v1261
        %1391 = vst.msk [vmem:[%s240 + $0xb8] sm:$0xff] %vm1367, %v1262
        %1392 = vst.msk [vmem:[%s240 + $0xc0] sm:$0xff] %vm1367, %v1263
        %1393 = vst.msk [vmem:[%s240 + $0xc8] sm:$0xff] %vm1367, %v1264
        %1394 = vst.msk [vmem:[%s240 + $0xd0] sm:$0xff] %vm1367, %v1265
        %1395 = vst.msk [vmem:[%s240 + $0xd8] sm:$0xff] %vm1367, %v1266
        %1396 = vst.msk [vmem:[%s240 + $0xe0] sm:$0xff] %vm1367, %v1267
        %1397 = vst.msk [vmem:[%s240 + $0xe8] sm:$0xff] %vm1367, %v1268
        %1398 = vst.msk [vmem:[%s240 + $0xf0] sm:$0xff] %vm1367, %v1269
        %1399 = vst.msk [vmem:[%s240 + $0xf8] sm:$0xff] %vm1367, %v1270
        %1400 = vst.msk [vmem:[%s240 + $0x100] sm:$0xff] %vm1367, %v1271
        %1401 = vst.msk [vmem:[%s240 + $0x108] sm:$0xff] %vm1367, %v1272
        %1402 = vst.msk [vmem:[%s240 + $0x110] sm:$0xff] %vm1367, %v1273
        %1403 = vst.msk [vmem:[%s240 + $0x118] sm:$0xff] %vm1367, %v1274
        %1404 = vst.msk [vmem:[%s240 + $0x120] sm:$0xff] %vm1367, %v1275
        %1405 = vst.msk [vmem:[%s240 + $0x128] sm:$0xff] %vm1367, %v1276
        %1406 = vst.msk [vmem:[%s240 + $0x130] sm:$0xff] %vm1367, %v1277
        %1407 = vst.msk [vmem:[%s240 + $0x138] sm:$0xff] %vm1367, %v1278
        %1408 = vst.msk [vmem:[%s240 + $0x140] sm:$0xff] %vm1367, %v1279
        %1409 = vst.msk [vmem:[%s240 + $0x148] sm:$0xff] %vm1367, %v1280
        %1410 = vst.msk [vmem:[%s240 + $0x150] sm:$0xff] %vm1367, %v1281
        %1411 = vst.msk [vmem:[%s240 + $0x158] sm:$0xff] %vm1367, %v1282
        %1412 = vst.msk [vmem:[%s240 + $0x160] sm:$0xff] %vm1367, %v1283
        %1413 = vst.msk [vmem:[%s240 + $0x168] sm:$0xff] %vm1367, %v1284
        %1414 = vst.msk [vmem:[%s240 + $0x170] sm:$0xff] %vm1367, %v1285
        %1415 = vst.msk [vmem:[%s240 + $0x178] sm:$0xff] %vm1367, %v1286
        %1416 = vst.msk [vmem:[%s240 + $0x180] sm:$0xff] %vm1367, %v1287
        %1417 = vst.msk [vmem:[%s240 + $0x188] sm:$0xff] %vm1367, %v1288
        %1418 = vst.msk [vmem:[%s240 + $0x190] sm:$0xff] %vm1367, %v1289
        %1419 = vst.msk [vmem:[%s240 + $0x198] sm:$0xff] %vm1367, %v1290
        %1420 = vst.msk [vmem:[%s240 + $0x1a0] sm:$0xff] %vm1367, %v1291
        %1421 = vst.msk [vmem:[%s240 + $0x1a8] sm:$0xff] %vm1367, %v1292
        %1422 = vst.msk [vmem:[%s240 + $0x1b0] sm:$0xff] %vm1367, %v1293
        %1423 = vst.msk [vmem:[%s240 + $0x1b8] sm:$0xff] %vm1367, %v1294
        %1424 = vst.msk [vmem:[%s240 + $0x1c0] sm:$0xff] %vm1367, %v1295
        %1425 = vst.msk [vmem:[%s240 + $0x1c8] sm:$0xff] %vm1367, %v1296
        %1426 = vst.msk [vmem:[%s240 + $0x1d0] sm:$0xff] %vm1367, %v1297
        %1427 = vst.msk [vmem:[%s240 + $0x1d8] sm:$0xff] %vm1367, %v1298
        %1428 = vst.msk [vmem:[%s240 + $0x1e0] sm:$0xff] %vm1367, %v1299
        %1429 = vst.msk [vmem:[%s240 + $0x1e8] sm:$0xff] %vm1367, %v1300
        %1430 = vst.msk [vmem:[%s240 + $0x1f0] sm:$0xff] %vm1367, %v1301
        %1431 = vst.msk [vmem:[%s240 + $0x1f8] sm:$0xff] %vm1367, %v1302
        %1432 = vst.msk [vmem:[%s240 + $0x200] sm:$0xff] %vm1367, %v1303
        %1433 = vst.msk [vmem:[%s240 + $0x208] sm:$0xff] %vm1367, %v1304
        %1434 = vst.msk [vmem:[%s240 + $0x210] sm:$0xff] %vm1367, %v1305
        %1435 = vst.msk [vmem:[%s240 + $0x218] sm:$0xff] %vm1367, %v1306
        %1436 = vst.msk [vmem:[%s240 + $0x220] sm:$0xff] %vm1367, %v1307
        %1437 = vst.msk [vmem:[%s240 + $0x228] sm:$0xff] %vm1367, %v1308
        %1438 = vst.msk [vmem:[%s240 + $0x230] sm:$0xff] %vm1367, %v1309
        %1439 = vst.msk [vmem:[%s240 + $0x238] sm:$0xff] %vm1367, %v1310
        %1440 = vst.msk [vmem:[%s240 + $0x240] sm:$0xff] %vm1367, %v1311
        %1441 = vst.msk [vmem:[%s240 + $0x248] sm:$0xff] %vm1367, %v1312
        %1442 = vst.msk [vmem:[%s240 + $0x250] sm:$0xff] %vm1367, %v1313
        %1443 = vst.msk [vmem:[%s240 + $0x258] sm:$0xff] %vm1367, %v1314
        %1444 = vst.msk [vmem:[%s240 + $0x260] sm:$0xff] %vm1367, %v1315
        %1445 = vst.msk [vmem:[%s240 + $0x268] sm:$0xff] %vm1367, %v1316
        %1446 = vst.msk [vmem:[%s240 + $0x270] sm:$0xff] %vm1367, %v1317
        %1447 = vst.msk [vmem:[%s240 + $0x278] sm:$0xff] %vm1367, %v1318
        %1448 = vst.msk [vmem:[%s240 + $0x280] sm:$0xff] %vm1367, %v1319
        %1449 = vst.msk [vmem:[%s240 + $0x288] sm:$0xff] %vm1367, %v1320
        %1450 = vst.msk [vmem:[%s240 + $0x290] sm:$0xff] %vm1367, %v1321
        %1451 = vst.msk [vmem:[%s240 + $0x298] sm:$0xff] %vm1367, %v1322
        %1452 = vst.msk [vmem:[%s240 + $0x2a0] sm:$0xff] %vm1367, %v1323
        %1453 = vst.msk [vmem:[%s240 + $0x2a8] sm:$0xff] %vm1367, %v1324
        %1454 = vst.msk [vmem:[%s240 + $0x2b0] sm:$0xff] %vm1367, %v1325
        %1455 = vst.msk [vmem:[%s240 + $0x2b8] sm:$0xff] %vm1367, %v1326
        %1456 = vst.msk [vmem:[%s240 + $0x2c0] sm:$0xff] %vm1367, %v1327
        %1457 = vst.msk [vmem:[%s240 + $0x2c8] sm:$0xff] %vm1367, %v1328
        %1458 = vst.msk [vmem:[%s240 + $0x2d0] sm:$0xff] %vm1367, %v1329
        %1459 = vst.msk [vmem:[%s240 + $0x2d8] sm:$0xff] %vm1367, %v1330
        %1460 = vst.msk [vmem:[%s240 + $0x2e0] sm:$0xff] %vm1367, %v1331
        %1461 = vst.msk [vmem:[%s240 + $0x2e8] sm:$0xff] %vm1367, %v1332
        %1462 = vst.msk [vmem:[%s240 + $0x2f0] sm:$0xff] %vm1367, %v1333
        %1463 = vst.msk [vmem:[%s240 + $0x2f8] sm:$0xff] %vm1367, %v1334
        %1464 = vst.msk [vmem:[%s240 + $0x300] sm:$0xff] %vm1367, %v1335
        %1465 = vst.msk [vmem:[%s240 + $0x308] sm:$0xff] %vm1367, %v1336
        %1466 = vst.msk [vmem:[%s240 + $0x310] sm:$0xff] %vm1367, %v1337
        %1467 = vst.msk [vmem:[%s240 + $0x318] sm:$0xff] %vm1367, %v1338
        %1468 = vst.msk [vmem:[%s240 + $0x320] sm:$0xff] %vm1367, %v1339
        %1469 = vst.msk [vmem:[%s240 + $0x328] sm:$0xff] %vm1367, %v1340
        %1470 = vst.msk [vmem:[%s240 + $0x330] sm:$0xff] %vm1367, %v1341
        %1471 = vst.msk [vmem:[%s240 + $0x338] sm:$0xff] %vm1367, %v1342
        %1472 = vst.msk [vmem:[%s240 + $0x340] sm:$0xff] %vm1367, %v1343
        %1473 = vst.msk [vmem:[%s240 + $0x348] sm:$0xff] %vm1367, %v1344
        %1474 = vst.msk [vmem:[%s240 + $0x350] sm:$0xff] %vm1367, %v1345
        %1475 = vst.msk [vmem:[%s240 + $0x358] sm:$0xff] %vm1367, %v1346
        %1476 = vst.msk [vmem:[%s240 + $0x360] sm:$0xff] %vm1367, %v1347
        %1477 = vst.msk [vmem:[%s240 + $0x368] sm:$0xff] %vm1367, %v1348
        %1478 = vst.msk [vmem:[%s240 + $0x370] sm:$0xff] %vm1367, %v1349
        %1479 = vst.msk [vmem:[%s240 + $0x378] sm:$0xff] %vm1367, %v1350
        %1480 = vst.msk [vmem:[%s240 + $0x380] sm:$0xff] %vm1367, %v1351
        %1481 = vst.msk [vmem:[%s240 + $0x388] sm:$0xff] %vm1367, %v1352
        %1482 = vst.msk [vmem:[%s240 + $0x390] sm:$0xff] %vm1367, %v1353
        %1483 = vst.msk [vmem:[%s240 + $0x398] sm:$0xff] %vm1367, %v1354
        %1484 = vst.msk [vmem:[%s240 + $0x3a0] sm:$0xff] %vm1367, %v1355
        %1485 = vst.msk [vmem:[%s240 + $0x3a8] sm:$0xff] %vm1367, %v1356
        %1486 = vst.msk [vmem:[%s240 + $0x3b0] sm:$0xff] %vm1367, %v1357
        %1487 = vst.msk [vmem:[%s240 + $0x3b8] sm:$0xff] %vm1367, %v1358
        %1488 = vst.msk [vmem:[%s240 + $0x3c0] sm:$0xff] %vm1367, %v1359
        %1489 = vst.msk [vmem:[%s240 + $0x3c8] sm:$0xff] %vm1367, %v1360
        %1490 = vst.msk [vmem:[%s240 + $0x3d0] sm:$0xff] %vm1367, %v1361
        %1491 = vst.msk [vmem:[%s240 + $0x3d8] sm:$0xff] %vm1367, %v1362
        %1492 = vst.msk [vmem:[%s240 + $0x3e0] sm:$0xff] %vm1367, %v1363
        %1493 = vst.msk [vmem:[%s240 + $0x3e8] sm:$0xff] %vm1367, %v1364
        %1494 = vst.msk [vmem:[%s240 + $0x3f0] sm:$0xff] %vm1367, %v1365
        %1495 = vst.msk [vmem:[%s240 + $0x3f8] sm:$0xff] %vm1367, %v1366
        %s1496 = smul.u32 128, %s21
        %p1497 = scmp.lt.s32.totalorder %s20, 1
        %s1498 = scalar_select %p1497, %s20, 1
        %p1499 = scmp.lt.s32.totalorder %s1496, 511
        %s1500 = scalar_select %p1499, %s1496, 511
        %s1501 = smul.addr %s1498, 512
        %s1502 = sadd.s32 %s1500, %s1501
        %s1503 = smul.addr %s1502, 8
        %s1504 = scalar_lea.vmem %s3, %s1503
        // Predicated region
        $region41: #{tpu_custom_call.1} parent=31 // pred_check
          %p1505 = pneg %p118
        $region42: #{tpu_custom_call.1} parent=31 // pred_check_branch
          %1507 = sbr.rel (%p1505) target = $region44
        $region43: #{tpu_custom_call.1} parent=31 // pred_region
          %s1508 = smul.u32 128, %s21
        $region44: #{tpu_custom_call.1} parent=31 // pred_fallthru
          _
      $region32: #{tpu_custom_call.1} parent=5 // pred_fallthru
        _
      %p1509 = scmp.le.s32.totalorder 2, %s11
      // Predicated region
      $region45: #{tpu_custom_call.1} parent=5 // pred_check
        %p1510 = pneg %p1509
      $region46: #{tpu_custom_call.1} parent=5 // pred_check_branch
        %1512 = sbr.rel (%p1510) target = $region48
      $region47: #{tpu_custom_call.1} parent=5 // pred_region
        %s1513 = ssub.s32 %s11, 2
        // Predicated region
        $region49: #{tpu_custom_call.1} parent=47 // pred_check
          %p1514 = pneg %p124
        $region50: #{tpu_custom_call.1} parent=47 // pred_check_branch
          %1516 = sbr.rel (%p1514) target = $region52
        $region51: #{tpu_custom_call.1} parent=47 // pred_region
          %s1517 = smul.u32 128, %s23
          %p1518 = scmp.lt.s32.totalorder %s22, 1
          %s1519 = scalar_select %p1518, %s22, 1
          %p1520 = scmp.lt.s32.totalorder %s1517, 511
          %s1521 = scalar_select %p1520, %s1517, 511
          %s1522 = smul.addr %s1519, 512
          %s1523 = sadd.s32 %s1521, %s1522
          %s1524 = smul.addr %s1523, 8
          %s1525 = scalar_lea.vmem %s3, %s1524
        $region52: #{tpu_custom_call.1} parent=47 // pred_fallthru
          _
      $region48: #{tpu_custom_call.1} parent=5 // pred_fallthru
        _
    $region6: #{tpu_custom_call.1} parent=1 // loop_footer
      %s15 = sadd.s32 1, %s11
    $region7: #{tpu_custom_call.1} parent=1 // loop_footer_branch
      %10 = sbr.rel target = $region3
    $region8: #{tpu_custom_call.1} parent=1 // loop_exit
      _
    %1526 = vsyncpa [#allocation3], 1
    %s1527 = scalar_lea.sflag [#allocation3], 1
    %1528 = vsyncpa %s1527, 1
    %1529 = vsyncpa [#allocation5], 1

</llo_original>
